<compile_context>
chip_gen: v7x
topology: tpu7x:2x2x1
jax: 0.10.0
libtpu: 0.0.40
codegen_flags: <defaults>
</compile_context>

<pallas_src>
import jax
import jax.numpy as jnp
from jax.experimental import pallas as pl
from jax.experimental.pallas import tpu as pltpu  # noqa: F401  (kept for TPU-specific extensions)

# Small shapes consistent with the module (num_channels=16 -> 8 -> 4 -> 64).
N, H, W = 2, 8, 8
C0, C1, C2, C3 = 16, 8, 4, 64
M = N * H  # batch stacked along sublanes -> a single kernel invocation


def _conv_row_matrices(w_hwio, width):
    """HWIO (3,3,cin,cout) -> (3, width*cin, width*cout) block-tridiagonal bf16.

    m[dy, wi*cin + ci, wo*cout + co] = w[dy, wi - wo + 1, ci, co]
    (zero when |wi - wo| > 1), folding the dx taps and the left/right zero
    padding of a 3x3/padding=1 conv into one matmul per kernel row dy.
    """
    kh, kw, cin, cout = w_hwio.shape
    m = jnp.zeros((kh, width * cin, width * cout), jnp.float32)
    for wo in range(width):
        for dx in range(kw):
            wi = wo + dx - 1
            if 0 <= wi < width:
                m = m.at[:, wi * cin:(wi + 1) * cin,
                         wo * cout:(wo + 1) * cout].set(w_hwio[:, dx])
    return m.astype(jnp.bfloat16)


def _shift_matrices():
    """(2, M, M) bf16 row-shift operators with per-image zero padding baked in.

    s[0] @ x -> x shifted down one row (row y gets x[y-1]; each image's top
    row becomes zero).  s[1] @ x -> x shifted up one row (row y gets x[y+1];
    each image's bottom row becomes zero).  Entries are exactly 0/1, so the
    bf16 MXU applies them exactly.
    """
    r = jnp.arange(M)
    up = (r[:, None] - 1 == r[None, :]) & (r[:, None] % H != 0)
    dn = (r[:, None] + 1 == r[None, :]) & (r[:, None] % H != H - 1)
    return jnp.stack([up, dn]).astype(jnp.bfloat16)


def prepare_encoder_params(params):
    """One-time host-side repack: HWIO conv weights -> banded matmul weights."""
    w1, b1, w2, b2, w3, b3 = params
    return (
        _shift_matrices(),
        _conv_row_matrices(w1, W),
        jnp.tile(b1, W).reshape(1, W * C1).astype(jnp.float32),
        _conv_row_matrices(w2, W),
        jnp.tile(b2, W).reshape(1, W * C2).astype(jnp.float32),
        _conv_row_matrices(w3, W),
        jnp.tile(b3, W).reshape(1, W * C3).astype(jnp.float32),
    )


def _conv3x3_relu(src, s_ref, w_ref, b_ref):
    """3x3 conv (padding=1) + ReLU on a lane-packed (M, W*cin) bf16 slab.

    Vertical taps come from two tiny exact shift-matrix matmuls (activations
    stay in vregs — no VMEM scratch roundtrip, no masks); the horizontal taps
    and padding live in the block-tridiagonal weights, so the layer body is
    just 3 main MXU matmuls with the bias folded into the accumulator init.
    """
    cout_lanes = w_ref.shape[2]
    up = jnp.dot(s_ref[0], src, preferred_element_type=jnp.float32).astype(jnp.bfloat16)
    dn = jnp.dot(s_ref[1], src, preferred_element_type=jnp.float32).astype(jnp.bfloat16)
    acc = jnp.broadcast_to(b_ref[...], (M, cout_lanes))          # bias init
    acc = acc + jnp.dot(up, w_ref[0], preferred_element_type=jnp.float32)
    acc = acc + jnp.dot(src, w_ref[1], preferred_element_type=jnp.float32)
    acc = acc + jnp.dot(dn, w_ref[2], preferred_element_type=jnp.float32)
    return jnp.maximum(acc, 0.0)                                 # (M, W*cout) f32


def encoder_kernel(x_ref, s_ref, w1_ref, b1_ref, w2_ref, b2_ref, w3_ref, b3_ref,
                   o_ref):
    h1 = _conv3x3_relu(x_ref[...], s_ref, w1_ref, b1_ref)               # (M, 64)
    h2 = _conv3x3_relu(h1.astype(jnp.bfloat16), s_ref, w2_ref, b2_ref)  # (M, 32)
    h3 = _conv3x3_relu(h2.astype(jnp.bfloat16), s_ref, w3_ref, b3_ref)  # (M, 512)
    o_ref[...] = h3                                                     # lane-dense store


@jax.jit
def encoder_forward(x_nchw, prepared):
    """x_nchw: (N, C0, H, W) float32 -> (N, 64, H, W) float32."""
    smat, w1m, b1r, w2m, b2r, w3m, b3r = prepared
    # NCHW -> lane-packed (N*H, W*C0) bf16 slab (batch stacked along sublanes).
    x2d = jnp.transpose(x_nchw, (0, 2, 3, 1)).reshape(M, W * C0).astype(jnp.bfloat16)

    flops = 2 * N * H * W * 9 * (C0 * C1 + C1 * C2 + C2 * C3)
    bytes_accessed = int(
        M * W * C0 * 2 + M * W * C3 * 4
        + sum(a.size * a.dtype.itemsize
              for a in (smat, w1m, b1r, w2m, b2r, w3m, b3r)))

    out = pl.pallas_call(
        encoder_kernel,
        out_shape=jax.ShapeDtypeStruct((M, W * C3), jnp.float32),
        in_specs=[
            pl.BlockSpec((M, W * C0), lambda: (0, 0)),
            pl.BlockSpec((2, M, M), lambda: (0, 0, 0)),
            pl.BlockSpec((3, W * C0, W * C1), lambda: (0, 0, 0)),
            pl.BlockSpec((1, W * C1), lambda: (0, 0)),
            pl.BlockSpec((3, W * C1, W * C2), lambda: (0, 0, 0)),
            pl.BlockSpec((1, W * C2), lambda: (0, 0)),
            pl.BlockSpec((3, W * C2, W * C3), lambda: (0, 0, 0)),
            pl.BlockSpec((1, W * C3), lambda: (0, 0)),
        ],
        out_specs=pl.BlockSpec((M, W * C3), lambda: (0, 0)),
        cost_estimate=pl.CostEstimate(flops=flops, transcendentals=0,
                                      bytes_accessed=bytes_accessed),
    )(x2d, smat, w1m, b1r, w2m, b2r, w3m, b3r)

    # (N*H, W*C3) -> NHWC -> NCHW (matches the PyTorch module's layout).
    # TODO(synk): skip this transpose if the downstream consumer accepts NHWC
    # or the lane-packed slab directly — at this size it rivals the kernel cost.
    return jnp.transpose(out.reshape(N, H, W, C3), (0, 3, 1, 2))


def _init_params(key):
    """Deterministic synthetic weights, HWIO layout."""
    ks = jax.random.split(key, 6)
    w1 = jax.random.normal(ks[0], (3, 3, C0, C1), jnp.float32) * 0.1
    b1 = jax.random.normal(ks[1], (C1,), jnp.float32) * 0.1
    w2 = jax.random.normal(ks[2], (3, 3, C1, C2), jnp.float32) * 0.1
    b2 = jax.random.normal(ks[3], (C2,), jnp.float32) * 0.1
    w3 = jax.random.normal(ks[4], (3, 3, C2, C3), jnp.float32) * 0.1
    b3 = jax.random.normal(ks[5], (C3,), jnp.float32) * 0.1
    return (w1, b1, w2, b2, w3, b3)


def _reference_forward(x_nchw, params):
    """Plain-JAX f32 reference matching PyTorch Conv2d(padding=1) + ReLU."""
    w1, b1, w2, b2, w3, b3 = params
    x = jnp.transpose(x_nchw, (0, 2, 3, 1))
    dn = ('NHWC', 'HWIO', 'NHWC')
    for w, b in ((w1, b1), (w2, b2), (w3, b3)):
        x = jax.lax.conv_general_dilated(x, w, (1, 1), 'SAME',
                                         dimension_numbers=dn)
        x = jnp.maximum(x + b, 0.0)
    return jnp.transpose(x, (0, 3, 1, 2))


if __name__ == "__main__":
    key = jax.random.PRNGKey(0)
    k_x, k_p = jax.random.split(key)
    x = jax.random.normal(k_x, (N, C0, H, W), jnp.float32)   # NCHW like PyTorch
    params = _init_params(k_p)
    prepared = prepare_encoder_params(params)

    out = jax.block_until_ready(encoder_forward(x, prepared))

    ref = _reference_forward(x, params)
    assert out.shape == (N, C3, H, W), out.shape
    # bf16 MXU operands (f32 accumulation) -> relaxed tolerance vs f32 reference.
    max_err = float(jnp.max(jnp.abs(out - ref)))
    assert jnp.allclose(out, ref, rtol=5e-2, atol=5e-2), max_err

    print("KERNEL_OK")
</pallas_src>

<mosaic_0001>
module attributes {stable_mosaic.version = 11 : i64} {
  func.func @encoder_kernel(%arg0: memref<16x128xbf16, #tpu.memory_space<vmem>>, %arg1: memref<2x16x16xbf16, #tpu.memory_space<vmem>>, %arg2: memref<3x128x64xbf16, #tpu.memory_space<vmem>>, %arg3: memref<1x64xf32, #tpu.memory_space<vmem>>, %arg4: memref<3x64x32xbf16, #tpu.memory_space<vmem>>, %arg5: memref<1x32xf32, #tpu.memory_space<vmem>>, %arg6: memref<3x32x512xbf16, #tpu.memory_space<vmem>>, %arg7: memref<1x512xf32, #tpu.memory_space<vmem>>, %arg8: memref<16x512xf32, #tpu.memory_space<vmem>>) attributes {dimension_semantics = [], scalar_prefetch = 0 : i64, scratch_operands = 0 : i64, tpu.core_type = #tpu.core_type<tc>} {
    %c0 = arith.constant 0 : index
    %c0_0 = arith.constant 0 : index
    %0 = vector.load %arg0[%c0, %c0_0] : memref<16x128xbf16, #tpu.memory_space<vmem>>, vector<16x128xbf16>
    %c0_1 = arith.constant 0 : index
    %c0_2 = arith.constant 0 : index
    %c0_3 = arith.constant 0 : index
    %1 = vector.load %arg1[%c0_1, %c0_2, %c0_3] : memref<2x16x16xbf16, #tpu.memory_space<vmem>>, vector<1x16x16xbf16>
    %2 = vector.shape_cast %1 : vector<1x16x16xbf16> to vector<16x16xbf16>
    %cst = arith.constant dense<0.000000e+00> : vector<16x128xf32>
    %3 = tpu.matmul %2, %0, %cst {dimension_numbers = #tpu.dot_dimension_numbers<[1], [0], [0], [1], [0, 0, 1, 1], [], []>} : vector<16x16xbf16>, vector<16x128xbf16>, vector<16x128xf32> -> vector<16x128xf32>
    %4 = arith.truncf %3 : vector<16x128xf32> to vector<16x128xbf16>
    %c1 = arith.constant 1 : index
    %c0_4 = arith.constant 0 : index
    %c0_5 = arith.constant 0 : index
    %5 = vector.load %arg1[%c1, %c0_4, %c0_5] : memref<2x16x16xbf16, #tpu.memory_space<vmem>>, vector<1x16x16xbf16>
    %6 = vector.shape_cast %5 : vector<1x16x16xbf16> to vector<16x16xbf16>
    %cst_6 = arith.constant dense<0.000000e+00> : vector<16x128xf32>
    %7 = tpu.matmul %6, %0, %cst_6 {dimension_numbers = #tpu.dot_dimension_numbers<[1], [0], [0], [1], [0, 0, 1, 1], [], []>} : vector<16x16xbf16>, vector<16x128xbf16>, vector<16x128xf32> -> vector<16x128xf32>
    %8 = arith.truncf %7 : vector<16x128xf32> to vector<16x128xbf16>
    %c0_7 = arith.constant 0 : index
    %c0_8 = arith.constant 0 : index
    %9 = vector.load %arg3[%c0_7, %c0_8] : memref<1x64xf32, #tpu.memory_space<vmem>>, vector<1x64xf32>
    %10 = vector.shape_cast %9 : vector<1x64xf32> to vector<1x64xf32>
    %11 = vector.broadcast %10 : vector<1x64xf32> to vector<16x64xf32>
    %c0_9 = arith.constant 0 : index
    %c0_10 = arith.constant 0 : index
    %c0_11 = arith.constant 0 : index
    %12 = vector.load %arg2[%c0_9, %c0_10, %c0_11] : memref<3x128x64xbf16, #tpu.memory_space<vmem>>, vector<1x128x64xbf16>
    %13 = vector.shape_cast %12 : vector<1x128x64xbf16> to vector<128x64xbf16>
    %cst_12 = arith.constant dense<0.000000e+00> : vector<16x64xf32>
    %14 = tpu.matmul %4, %13, %cst_12 {dimension_numbers = #tpu.dot_dimension_numbers<[1], [0], [0], [1], [0, 0, 1, 1], [], []>} : vector<16x128xbf16>, vector<128x64xbf16>, vector<16x64xf32> -> vector<16x64xf32>
    %15 = arith.addf %11, %14 : vector<16x64xf32>
    %c1_13 = arith.constant 1 : index
    %c0_14 = arith.constant 0 : index
    %c0_15 = arith.constant 0 : index
    %16 = vector.load %arg2[%c1_13, %c0_14, %c0_15] : memref<3x128x64xbf16, #tpu.memory_space<vmem>>, vector<1x128x64xbf16>
    %17 = vector.shape_cast %16 : vector<1x128x64xbf16> to vector<128x64xbf16>
    %cst_16 = arith.constant dense<0.000000e+00> : vector<16x64xf32>
    %18 = tpu.matmul %0, %17, %cst_16 {dimension_numbers = #tpu.dot_dimension_numbers<[1], [0], [0], [1], [0, 0, 1, 1], [], []>} : vector<16x128xbf16>, vector<128x64xbf16>, vector<16x64xf32> -> vector<16x64xf32>
    %19 = arith.addf %15, %18 : vector<16x64xf32>
    %c2 = arith.constant 2 : index
    %c0_17 = arith.constant 0 : index
    %c0_18 = arith.constant 0 : index
    %20 = vector.load %arg2[%c2, %c0_17, %c0_18] : memref<3x128x64xbf16, #tpu.memory_space<vmem>>, vector<1x128x64xbf16>
    %21 = vector.shape_cast %20 : vector<1x128x64xbf16> to vector<128x64xbf16>
    %cst_19 = arith.constant dense<0.000000e+00> : vector<16x64xf32>
    %22 = tpu.matmul %8, %21, %cst_19 {dimension_numbers = #tpu.dot_dimension_numbers<[1], [0], [0], [1], [0, 0, 1, 1], [], []>} : vector<16x128xbf16>, vector<128x64xbf16>, vector<16x64xf32> -> vector<16x64xf32>
    %23 = arith.addf %19, %22 : vector<16x64xf32>
    %cst_20 = arith.constant 0.000000e+00 : f32
    %24 = vector.broadcast %cst_20 : f32 to vector<16x64xf32>
    %25 = arith.maximumf %23, %24 : vector<16x64xf32>
    %26 = arith.truncf %25 : vector<16x64xf32> to vector<16x64xbf16>
    %c0_21 = arith.constant 0 : index
    %c0_22 = arith.constant 0 : index
    %c0_23 = arith.constant 0 : index
    %27 = vector.load %arg1[%c0_21, %c0_22, %c0_23] : memref<2x16x16xbf16, #tpu.memory_space<vmem>>, vector<1x16x16xbf16>
    %28 = vector.shape_cast %27 : vector<1x16x16xbf16> to vector<16x16xbf16>
    %cst_24 = arith.constant dense<0.000000e+00> : vector<16x64xf32>
    %29 = tpu.matmul %28, %26, %cst_24 {dimension_numbers = #tpu.dot_dimension_numbers<[1], [0], [0], [1], [0, 0, 1, 1], [], []>} : vector<16x16xbf16>, vector<16x64xbf16>, vector<16x64xf32> -> vector<16x64xf32>
    %30 = arith.truncf %29 : vector<16x64xf32> to vector<16x64xbf16>
    %c1_25 = arith.constant 1 : index
    %c0_26 = arith.constant 0 : index
    %c0_27 = arith.constant 0 : index
    %31 = vector.load %arg1[%c1_25, %c0_26, %c0_27] : memref<2x16x16xbf16, #tpu.memory_space<vmem>>, vector<1x16x16xbf16>
    %32 = vector.shape_cast %31 : vector<1x16x16xbf16> to vector<16x16xbf16>
    %cst_28 = arith.constant dense<0.000000e+00> : vector<16x64xf32>
    %33 = tpu.matmul %32, %26, %cst_28 {dimension_numbers = #tpu.dot_dimension_numbers<[1], [0], [0], [1], [0, 0, 1, 1], [], []>} : vector<16x16xbf16>, vector<16x64xbf16>, vector<16x64xf32> -> vector<16x64xf32>
    %34 = arith.truncf %33 : vector<16x64xf32> to vector<16x64xbf16>
    %c0_29 = arith.constant 0 : index
    %c0_30 = arith.constant 0 : index
    %35 = vector.load %arg5[%c0_29, %c0_30] : memref<1x32xf32, #tpu.memory_space<vmem>>, vector<1x32xf32>
    %36 = vector.shape_cast %35 : vector<1x32xf32> to vector<1x32xf32>
    %37 = vector.broadcast %36 : vector<1x32xf32> to vector<16x32xf32>
    %c0_31 = arith.constant 0 : index
    %c0_32 = arith.constant 0 : index
    %c0_33 = arith.constant 0 : index
    %38 = vector.load %arg4[%c0_31, %c0_32, %c0_33] : memref<3x64x32xbf16, #tpu.memory_space<vmem>>, vector<1x64x32xbf16>
    %39 = vector.shape_cast %38 : vector<1x64x32xbf16> to vector<64x32xbf16>
    %cst_34 = arith.constant dense<0.000000e+00> : vector<16x32xf32>
    %40 = tpu.matmul %30, %39, %cst_34 {dimension_numbers = #tpu.dot_dimension_numbers<[1], [0], [0], [1], [0, 0, 1, 1], [], []>} : vector<16x64xbf16>, vector<64x32xbf16>, vector<16x32xf32> -> vector<16x32xf32>
    %41 = arith.addf %37, %40 : vector<16x32xf32>
    %c1_35 = arith.constant 1 : index
    %c0_36 = arith.constant 0 : index
    %c0_37 = arith.constant 0 : index
    %42 = vector.load %arg4[%c1_35, %c0_36, %c0_37] : memref<3x64x32xbf16, #tpu.memory_space<vmem>>, vector<1x64x32xbf16>
    %43 = vector.shape_cast %42 : vector<1x64x32xbf16> to vector<64x32xbf16>
    %cst_38 = arith.constant dense<0.000000e+00> : vector<16x32xf32>
    %44 = tpu.matmul %26, %43, %cst_38 {dimension_numbers = #tpu.dot_dimension_numbers<[1], [0], [0], [1], [0, 0, 1, 1], [], []>} : vector<16x64xbf16>, vector<64x32xbf16>, vector<16x32xf32> -> vector<16x32xf32>
    %45 = arith.addf %41, %44 : vector<16x32xf32>
    %c2_39 = arith.constant 2 : index
    %c0_40 = arith.constant 0 : index
    %c0_41 = arith.constant 0 : index
    %46 = vector.load %arg4[%c2_39, %c0_40, %c0_41] : memref<3x64x32xbf16, #tpu.memory_space<vmem>>, vector<1x64x32xbf16>
    %47 = vector.shape_cast %46 : vector<1x64x32xbf16> to vector<64x32xbf16>
    %cst_42 = arith.constant dense<0.000000e+00> : vector<16x32xf32>
    %48 = tpu.matmul %34, %47, %cst_42 {dimension_numbers = #tpu.dot_dimension_numbers<[1], [0], [0], [1], [0, 0, 1, 1], [], []>} : vector<16x64xbf16>, vector<64x32xbf16>, vector<16x32xf32> -> vector<16x32xf32>
    %49 = arith.addf %45, %48 : vector<16x32xf32>
    %cst_43 = arith.constant 0.000000e+00 : f32
    %50 = vector.broadcast %cst_43 : f32 to vector<16x32xf32>
    %51 = arith.maximumf %49, %50 : vector<16x32xf32>
    %52 = arith.truncf %51 : vector<16x32xf32> to vector<16x32xbf16>
    %c0_44 = arith.constant 0 : index
    %c0_45 = arith.constant 0 : index
    %c0_46 = arith.constant 0 : index
    %53 = vector.load %arg1[%c0_44, %c0_45, %c0_46] : memref<2x16x16xbf16, #tpu.memory_space<vmem>>, vector<1x16x16xbf16>
    %54 = vector.shape_cast %53 : vector<1x16x16xbf16> to vector<16x16xbf16>
    %cst_47 = arith.constant dense<0.000000e+00> : vector<16x32xf32>
    %55 = tpu.matmul %54, %52, %cst_47 {dimension_numbers = #tpu.dot_dimension_numbers<[1], [0], [0], [1], [0, 0, 1, 1], [], []>} : vector<16x16xbf16>, vector<16x32xbf16>, vector<16x32xf32> -> vector<16x32xf32>
    %56 = arith.truncf %55 : vector<16x32xf32> to vector<16x32xbf16>
    %c1_48 = arith.constant 1 : index
    %c0_49 = arith.constant 0 : index
    %c0_50 = arith.constant 0 : index
    %57 = vector.load %arg1[%c1_48, %c0_49, %c0_50] : memref<2x16x16xbf16, #tpu.memory_space<vmem>>, vector<1x16x16xbf16>
    %58 = vector.shape_cast %57 : vector<1x16x16xbf16> to vector<16x16xbf16>
    %cst_51 = arith.constant dense<0.000000e+00> : vector<16x32xf32>
    %59 = tpu.matmul %58, %52, %cst_51 {dimension_numbers = #tpu.dot_dimension_numbers<[1], [0], [0], [1], [0, 0, 1, 1], [], []>} : vector<16x16xbf16>, vector<16x32xbf16>, vector<16x32xf32> -> vector<16x32xf32>
    %60 = arith.truncf %59 : vector<16x32xf32> to vector<16x32xbf16>
    %c0_52 = arith.constant 0 : index
    %c0_53 = arith.constant 0 : index
    %61 = vector.load %arg7[%c0_52, %c0_53] : memref<1x512xf32, #tpu.memory_space<vmem>>, vector<1x512xf32>
    %62 = vector.shape_cast %61 : vector<1x512xf32> to vector<1x512xf32>
    %63 = vector.broadcast %62 : vector<1x512xf32> to vector<16x512xf32>
    %c0_54 = arith.constant 0 : index
    %c0_55 = arith.constant 0 : index
    %c0_56 = arith.constant 0 : index
    %64 = vector.load %arg6[%c0_54, %c0_55, %c0_56] : memref<3x32x512xbf16, #tpu.memory_space<vmem>>, vector<1x32x512xbf16>
    %65 = vector.shape_cast %64 : vector<1x32x512xbf16> to vector<32x512xbf16>
    %cst_57 = arith.constant dense<0.000000e+00> : vector<16x512xf32>
    %66 = tpu.matmul %56, %65, %cst_57 {dimension_numbers = #tpu.dot_dimension_numbers<[1], [0], [0], [1], [0, 0, 1, 1], [], []>} : vector<16x32xbf16>, vector<32x512xbf16>, vector<16x512xf32> -> vector<16x512xf32>
    %67 = arith.addf %63, %66 : vector<16x512xf32>
    %c1_58 = arith.constant 1 : index
    %c0_59 = arith.constant 0 : index
    %c0_60 = arith.constant 0 : index
    %68 = vector.load %arg6[%c1_58, %c0_59, %c0_60] : memref<3x32x512xbf16, #tpu.memory_space<vmem>>, vector<1x32x512xbf16>
    %69 = vector.shape_cast %68 : vector<1x32x512xbf16> to vector<32x512xbf16>
    %cst_61 = arith.constant dense<0.000000e+00> : vector<16x512xf32>
    %70 = tpu.matmul %52, %69, %cst_61 {dimension_numbers = #tpu.dot_dimension_numbers<[1], [0], [0], [1], [0, 0, 1, 1], [], []>} : vector<16x32xbf16>, vector<32x512xbf16>, vector<16x512xf32> -> vector<16x512xf32>
    %71 = arith.addf %67, %70 : vector<16x512xf32>
    %c2_62 = arith.constant 2 : index
    %c0_63 = arith.constant 0 : index
    %c0_64 = arith.constant 0 : index
    %72 = vector.load %arg6[%c2_62, %c0_63, %c0_64] : memref<3x32x512xbf16, #tpu.memory_space<vmem>>, vector<1x32x512xbf16>
    %73 = vector.shape_cast %72 : vector<1x32x512xbf16> to vector<32x512xbf16>
    %cst_65 = arith.constant dense<0.000000e+00> : vector<16x512xf32>
    %74 = tpu.matmul %60, %73, %cst_65 {dimension_numbers = #tpu.dot_dimension_numbers<[1], [0], [0], [1], [0, 0, 1, 1], [], []>} : vector<16x32xbf16>, vector<32x512xbf16>, vector<16x512xf32> -> vector<16x512xf32>
    %75 = arith.addf %71, %74 : vector<16x512xf32>
    %cst_66 = arith.constant 0.000000e+00 : f32
    %76 = vector.broadcast %cst_66 : f32 to vector<16x512xf32>
    %77 = arith.maximumf %75, %76 : vector<16x512xf32>
    %c0_67 = arith.constant 0 : index
    %c0_68 = arith.constant 0 : index
    %78 = vector.load %arg8[%c0_67, %c0_68] : memref<16x512xf32, #tpu.memory_space<vmem>>, vector<16x512xf32>
    tpu.vector_store %arg8[%c0_67, %c0_68], %77 {strides = array<i32>} : memref<16x512xf32, #tpu.memory_space<vmem>>, vector<16x512xf32>,
    return
  }
}

</mosaic_0001>

<llo_original>
// kernel: encoder_forward.1
$region0: #{encoder_forward.1}
  #allocation0 [shape = 'u32[]', space=smem, size = 0x4, offset = 0x4, fixed_abs, tag = 'smem constant byte address 0x4 - core index']
  #allocation1 [shape = 'u32[144,128]{1,0:T(1,128)}', space=vmem, size = 0x12000, scoped, tag = 'internal scratch']
  %s0 = inlined_call_operand.vmem [shape: bf16[16,128], index: 0, kind: input, shape index: {}]
  %s1 = inlined_call_operand.vmem [shape: bf16[2,16,16], index: 1, kind: input, shape index: {}]
  %s2 = inlined_call_operand.vmem [shape: bf16[3,128,64], index: 2, kind: input, shape index: {}]
  %s3 = inlined_call_operand.vmem [shape: f32[1,64], index: 3, kind: input, shape index: {}]
  %s4 = inlined_call_operand.vmem [shape: bf16[3,64,32], index: 4, kind: input, shape index: {}]
  %s5 = inlined_call_operand.vmem [shape: f32[1,32], index: 5, kind: input, shape index: {}]
  %s6 = inlined_call_operand.vmem [shape: bf16[3,32,512], index: 6, kind: input, shape index: {}]
  %s7 = inlined_call_operand.vmem [shape: f32[1,512], index: 7, kind: input, shape index: {}]
  %s8 = inlined_call_operand.vmem [shape: f32[16,512], index: 8, kind: output, shape index: {}]
  %s9 = sld [smem:[#allocation0]]
  $region42: #{encoder_forward.1} parent=0
    _
  %s11 = ssub.s32 1, %s9
  %s12 = scalar_select 0, %s11, %s9
  // Predicated region
  $region2: #{encoder_forward.1} parent=0 // pred_check
    _
  $region3: #{encoder_forward.1} parent=0 // pred_check_branch
    %14 = sbr.rel (0) target = $region5
  $region4: #{encoder_forward.1} parent=0 // pred_region
    _
  $region5: #{encoder_forward.1} parent=0 // pred_fallthru
    _
  // Predicated region
  $region6: #{encoder_forward.1} parent=0 // pred_check
    _
  $region7: #{encoder_forward.1} parent=0 // pred_check_branch
    %16 = sbr.rel (0) target = $region9
  $region8: #{encoder_forward.1} parent=0 // pred_region
    _
  $region9: #{encoder_forward.1} parent=0 // pred_fallthru
    _
  // Predicated region
  $region10: #{encoder_forward.1} parent=0 // pred_check
    _
  $region11: #{encoder_forward.1} parent=0 // pred_check_branch
    %18 = sbr.rel (0) target = $region13
  $region12: #{encoder_forward.1} parent=0 // pred_region
    _
  $region13: #{encoder_forward.1} parent=0 // pred_fallthru
    _
  // Predicated region
  $region14: #{encoder_forward.1} parent=0 // pred_check
    _
  $region15: #{encoder_forward.1} parent=0 // pred_check_branch
    %20 = sbr.rel (0) target = $region17
  $region16: #{encoder_forward.1} parent=0 // pred_region
    _
  $region17: #{encoder_forward.1} parent=0 // pred_fallthru
    _
  // Predicated region
  $region18: #{encoder_forward.1} parent=0 // pred_check
    _
  $region19: #{encoder_forward.1} parent=0 // pred_check_branch
    %22 = sbr.rel (0) target = $region21
  $region20: #{encoder_forward.1} parent=0 // pred_region
    _
  $region21: #{encoder_forward.1} parent=0 // pred_fallthru
    _
  // Predicated region
  $region22: #{encoder_forward.1} parent=0 // pred_check
    _
  $region23: #{encoder_forward.1} parent=0 // pred_check_branch
    %24 = sbr.rel (0) target = $region25
  $region24: #{encoder_forward.1} parent=0 // pred_region
    _
  $region25: #{encoder_forward.1} parent=0 // pred_fallthru
    _
  // Predicated region
  $region26: #{encoder_forward.1} parent=0 // pred_check
    _
  $region27: #{encoder_forward.1} parent=0 // pred_check_branch
    %26 = sbr.rel (0) target = $region29
  $region28: #{encoder_forward.1} parent=0 // pred_region
    _
  $region29: #{encoder_forward.1} parent=0 // pred_fallthru
    _
  // Predicated region
  $region30: #{encoder_forward.1} parent=0 // pred_check
    _
  $region31: #{encoder_forward.1} parent=0 // pred_check_branch
    %28 = sbr.rel (0) target = $region33
  $region32: #{encoder_forward.1} parent=0 // pred_region
    _
  $region33: #{encoder_forward.1} parent=0 // pred_fallthru
    _
  %v30 = vld [vmem:[%s0] sm:$0xf]
  %v31 = vld [vmem:[%s0 + $0x4] sm:$0xf]
  %v32 = vld [vmem:[%s1] sm:$0xf]
  %v33 = vld [vmem:[%s1 + $0x4] sm:$0xf]
  %v36 = vunpack.c.l.b16 %v32
  %v37 = vunpack.c.l.b16 %v33
  %v38 = vpack.c.b16 %v37, %v36
  %v41 = vunpack.c.l.b16 %v30
  %v42 = vunpack.c.l.b16 %v31
  %v43 = vpack.c.b16 %v42, %v41
  %vm45 = vcmask 130048
  %v47 = vsel %vm45, %v38, 0
  %49 = vmatprep.subr.bf16.mxu0 0
  %50 = vmatpush1.bf16.msra.mxu0 %v43
  %51 = vmatprep.subr.bf16.mxu0 0
  %52 = vmatpush1.bf16.msra.mxu0 0
  %53 = vmatprep.subr.bf16.mxu0 0
  %54 = vmatpush1.bf16.msra.mxu0 0
  %55 = vmatprep.subr.bf16.mxu0 0
  %56 = vmatpush1.bf16.msra.mxu0 0
  %57 = vmatprep.subr.bf16.mxu0 0
  %58 = vmatpush1.bf16.msra.mxu0 0
  %59 = vmatprep.subr.bf16.mxu0 0
  %60 = vmatpush1.bf16.msra.mxu0 0
  %61 = vmatprep.subr.bf16.mxu0 0
  %62 = vmatpush1.bf16.msra.mxu0 0
  %63 = vmatprep.subr.bf16.mxu0 0
  %64 = vmatpush1.bf16.msra.mxu0 0
  %65 = vmatprep.subr.bf16.mxu0 0
  %66 = vmatpush1.bf16.msra.mxu0 0
  %67 = vmatprep.subr.bf16.mxu0 0
  %68 = vmatpush1.bf16.msra.mxu0 0
  %69 = vmatprep.subr.bf16.mxu0 0
  %70 = vmatpush1.bf16.msra.mxu0 0
  %71 = vmatprep.subr.bf16.mxu0 0
  %72 = vmatpush1.bf16.msra.mxu0 0
  %73 = vmatprep.subr.bf16.mxu0 0
  %74 = vmatpush1.bf16.msra.mxu0 0
  %75 = vmatprep.subr.bf16.mxu0 0
  %76 = vmatpush1.bf16.msra.mxu0 0
  %77 = vmatprep.subr.bf16.mxu0 0
  %78 = vmatpush1.bf16.msra.mxu0 0
  %79 = vmatprep.subr.bf16.mxu0 0
  %80 = vmatpush1.bf16.msra.mxu0 0
  %81 = vmatprep.mubr.bf16.mxu0 0
  %82 = vmatmul.mubr.bf16.gmra.mrb[0].mxu0 %v47
  %v83 = vpop.f32.mrb[0].mxu0
  %v84 = vadd.f32 0.0, %v83
  %v85 = vpop.f32.mrb[0].mxu0
  %v86 = vpop.f32.mrb[0].mxu0
  %v87 = vadd.f32 0.0, %v86
  %v88 = vpop.f32.mrb[0].mxu0
  %89 = vdwg.mxu0
  %v90 = vpack.c.bf16 %v87, %v84
  %s91 = scalar_lea.vmem %s1, 8
  %v92 = vld [vmem:[%s91] sm:$0xf]
  %v93 = vld [vmem:[%s91 + $0x4] sm:$0xf]
  %v96 = vunpack.c.l.b16 %v92
  %v97 = vunpack.c.l.b16 %v93
  %v98 = vpack.c.b16 %v97, %v96
  %v100 = vsel %vm45, %v98, 0
  %102 = vmatprep.subr.bf16.mxu0 0
  %103 = vmatpush1.bf16.msra.mxu0 %v43
  %104 = vmatprep.subr.bf16.mxu0 0
  %105 = vmatpush1.bf16.msra.mxu0 0
  %106 = vmatprep.subr.bf16.mxu0 0
  %107 = vmatpush1.bf16.msra.mxu0 0
  %108 = vmatprep.subr.bf16.mxu0 0
  %109 = vmatpush1.bf16.msra.mxu0 0
  %110 = vmatprep.subr.bf16.mxu0 0
  %111 = vmatpush1.bf16.msra.mxu0 0
  %112 = vmatprep.subr.bf16.mxu0 0
  %113 = vmatpush1.bf16.msra.mxu0 0
  %114 = vmatprep.subr.bf16.mxu0 0
  %115 = vmatpush1.bf16.msra.mxu0 0
  %116 = vmatprep.subr.bf16.mxu0 0
  %117 = vmatpush1.bf16.msra.mxu0 0
  %118 = vmatprep.subr.bf16.mxu0 0
  %119 = vmatpush1.bf16.msra.mxu0 0
  %120 = vmatprep.subr.bf16.mxu0 0
  %121 = vmatpush1.bf16.msra.mxu0 0
  %122 = vmatprep.subr.bf16.mxu0 0
  %123 = vmatpush1.bf16.msra.mxu0 0
  %124 = vmatprep.subr.bf16.mxu0 0
  %125 = vmatpush1.bf16.msra.mxu0 0
  %126 = vmatprep.subr.bf16.mxu0 0
  %127 = vmatpush1.bf16.msra.mxu0 0
  %128 = vmatprep.subr.bf16.mxu0 0
  %129 = vmatpush1.bf16.msra.mxu0 0
  %130 = vmatprep.subr.bf16.mxu0 0
  %131 = vmatpush1.bf16.msra.mxu0 0
  %132 = vmatprep.subr.bf16.mxu0 0
  %133 = vmatpush1.bf16.msra.mxu0 0
  %134 = vmatprep.mubr.bf16.mxu0 0
  %135 = vmatmul.mubr.bf16.gmra.mrb[0].mxu0 %v100
  %v136 = vpop.f32.mrb[0].mxu0
  %v137 = vadd.f32 0.0, %v136
  %v138 = vpop.f32.mrb[0].mxu0
  %v139 = vpop.f32.mrb[0].mxu0
  %v140 = vadd.f32 0.0, %v139
  %v141 = vpop.f32.mrb[0].mxu0
  %142 = vdwg.mxu0
  %v143 = vpack.c.bf16 %v140, %v137
  %v144 = vld [vmem:[%s3] sm:$0x1]
  %v146 = vlaneseq
  %v147 = vshrl.u32 %v146, 7
  %v148 = vsub.s32 0, %v147
  %v149 = vrot.slane %v144, %v148
  %v151 = vld [vmem:[%s2] sm:$0xf]
  %v152 = vld [vmem:[%s2 + $0x4] sm:$0xf]
  %v153 = vld [vmem:[%s2 + $0x8] sm:$0xf]
  %v154 = vld [vmem:[%s2 + $0xc] sm:$0xf]
  %v155 = vld [vmem:[%s2 + $0x10] sm:$0xf]
  %v156 = vld [vmem:[%s2 + $0x14] sm:$0xf]
  %v157 = vld [vmem:[%s2 + $0x18] sm:$0xf]
  %v158 = vld [vmem:[%s2 + $0x1c] sm:$0xf]
  %v159 = vld [vmem:[%s2 + $0x20] sm:$0xf]
  %v160 = vld [vmem:[%s2 + $0x24] sm:$0xf]
  %v161 = vld [vmem:[%s2 + $0x28] sm:$0xf]
  %v162 = vld [vmem:[%s2 + $0x2c] sm:$0xf]
  %v163 = vld [vmem:[%s2 + $0x30] sm:$0xf]
  %v164 = vld [vmem:[%s2 + $0x34] sm:$0xf]
  %v165 = vld [vmem:[%s2 + $0x38] sm:$0xf]
  %v166 = vld [vmem:[%s2 + $0x3c] sm:$0xf]
  %v183 = vunpack.c.l.b16 %v151
  %v184 = vunpack.c.l.b16 %v152
  %v185 = vunpack.c.l.b16 %v153
  %v186 = vunpack.c.l.b16 %v154
  %v187 = vunpack.c.l.b16 %v155
  %v188 = vunpack.c.l.b16 %v156
  %v189 = vunpack.c.l.b16 %v157
  %v190 = vunpack.c.l.b16 %v158
  %v191 = vunpack.c.l.b16 %v159
  %v192 = vunpack.c.l.b16 %v160
  %v193 = vunpack.c.l.b16 %v161
  %v194 = vunpack.c.l.b16 %v162
  %v195 = vunpack.c.l.b16 %v163
  %v196 = vunpack.c.l.b16 %v164
  %v197 = vunpack.c.l.b16 %v165
  %v198 = vunpack.c.l.b16 %v166
  %v199 = vpack.c.b16 %v184, %v183
  %v200 = vpack.c.b16 %v186, %v185
  %v201 = vpack.c.b16 %v188, %v187
  %v202 = vpack.c.b16 %v190, %v189
  %v203 = vpack.c.b16 %v192, %v191
  %v204 = vpack.c.b16 %v194, %v193
  %v205 = vpack.c.b16 %v196, %v195
  %v206 = vpack.c.b16 %v198, %v197
  %215 = vmatprep.subr.bf16.mxu0 0
  %216 = vmatpush1.bf16.msra.mxu0 %v199
  %217 = vmatprep.subr.bf16.mxu0 0
  %218 = vmatpush1.bf16.msra.mxu0 %v200
  %219 = vmatprep.subr.bf16.mxu0 0
  %220 = vmatpush1.bf16.msra.mxu0 %v201
  %221 = vmatprep.subr.bf16.mxu0 0
  %222 = vmatpush1.bf16.msra.mxu0 %v202
  %223 = vmatprep.subr.bf16.mxu0 0
  %224 = vmatpush1.bf16.msra.mxu0 %v203
  %225 = vmatprep.subr.bf16.mxu0 0
  %226 = vmatpush1.bf16.msra.mxu0 %v204
  %227 = vmatprep.subr.bf16.mxu0 0
  %228 = vmatpush1.bf16.msra.mxu0 %v205
  %229 = vmatprep.subr.bf16.mxu0 0
  %230 = vmatpush1.bf16.msra.mxu0 %v206
  %231 = vmatprep.subr.bf16.mxu0 0
  %232 = vmatpush1.bf16.msra.mxu0 0
  %233 = vmatprep.subr.bf16.mxu0 0
  %234 = vmatpush1.bf16.msra.mxu0 0
  %235 = vmatprep.subr.bf16.mxu0 0
  %236 = vmatpush1.bf16.msra.mxu0 0
  %237 = vmatprep.subr.bf16.mxu0 0
  %238 = vmatpush1.bf16.msra.mxu0 0
  %239 = vmatprep.subr.bf16.mxu0 0
  %240 = vmatpush1.bf16.msra.mxu0 0
  %241 = vmatprep.subr.bf16.mxu0 0
  %242 = vmatpush1.bf16.msra.mxu0 0
  %243 = vmatprep.subr.bf16.mxu0 0
  %244 = vmatpush1.bf16.msra.mxu0 0
  %245 = vmatprep.subr.bf16.mxu0 0
  %246 = vmatpush1.bf16.msra.mxu0 0
  %247 = vmatprep.mubr.bf16.mxu0 0
  %248 = vmatmul.mubr.bf16.gmra.mrb[0].mxu0 %v90
  %v249 = vpop.f32.mrb[0].mxu0
  %v250 = vadd.f32 0.0, %v249
  %v251 = vpop.f32.mrb[0].mxu0
  %v252 = vpop.f32.mrb[0].mxu0
  %v253 = vadd.f32 0.0, %v252
  %v254 = vpop.f32.mrb[0].mxu0
  %255 = vdwg.mxu0
  %v256 = vadd.f32 %v149, %v250
  %v257 = vadd.f32 %v149, %v253
  %s258 = scalar_lea.vmem %s2, 64
  %v259 = vld [vmem:[%s258] sm:$0xf]
  %v260 = vld [vmem:[%s258 + $0x4] sm:$0xf]
  %v261 = vld [vmem:[%s258 + $0x8] sm:$0xf]
  %v262 = vld [vmem:[%s258 + $0xc] sm:$0xf]
  %v263 = vld [vmem:[%s258 + $0x10] sm:$0xf]
  %v264 = vld [vmem:[%s258 + $0x14] sm:$0xf]
  %v265 = vld [vmem:[%s258 + $0x18] sm:$0xf]
  %v266 = vld [vmem:[%s258 + $0x1c] sm:$0xf]
  %v267 = vld [vmem:[%s258 + $0x20] sm:$0xf]
  %v268 = vld [vmem:[%s258 + $0x24] sm:$0xf]
  %v269 = vld [vmem:[%s258 + $0x28] sm:$0xf]
  %v270 = vld [vmem:[%s258 + $0x2c] sm:$0xf]
  %v271 = vld [vmem:[%s258 + $0x30] sm:$0xf]
  %v272 = vld [vmem:[%s258 + $0x34] sm:$0xf]
  %v273 = vld [vmem:[%s258 + $0x38] sm:$0xf]
  %v274 = vld [vmem:[%s258 + $0x3c] sm:$0xf]
  %v291 = vunpack.c.l.b16 %v259
  %v292 = vunpack.c.l.b16 %v260
  %v293 = vunpack.c.l.b16 %v261
  %v294 = vunpack.c.l.b16 %v262
  %v295 = vunpack.c.l.b16 %v263
  %v296 = vunpack.c.l.b16 %v264
  %v297 = vunpack.c.l.b16 %v265
  %v298 = vunpack.c.l.b16 %v266
  %v299 = vunpack.c.l.b16 %v267
  %v300 = vunpack.c.l.b16 %v268
  %v301 = vunpack.c.l.b16 %v269
  %v302 = vunpack.c.l.b16 %v270
  %v303 = vunpack.c.l.b16 %v271
  %v304 = vunpack.c.l.b16 %v272
  %v305 = vunpack.c.l.b16 %v273
  %v306 = vunpack.c.l.b16 %v274
  %v307 = vpack.c.b16 %v292, %v291
  %v308 = vpack.c.b16 %v294, %v293
  %v309 = vpack.c.b16 %v296, %v295
  %v310 = vpack.c.b16 %v298, %v297
  %v311 = vpack.c.b16 %v300, %v299
  %v312 = vpack.c.b16 %v302, %v301
  %v313 = vpack.c.b16 %v304, %v303
  %v314 = vpack.c.b16 %v306, %v305
  %323 = vmatprep.subr.bf16.mxu0 0
  %324 = vmatpush1.bf16.msra.mxu0 %v307
  %325 = vmatprep.subr.bf16.mxu0 0
  %326 = vmatpush1.bf16.msra.mxu0 %v308
  %327 = vmatprep.subr.bf16.mxu0 0
  %328 = vmatpush1.bf16.msra.mxu0 %v309
  %329 = vmatprep.subr.bf16.mxu0 0
  %330 = vmatpush1.bf16.msra.mxu0 %v310
  %331 = vmatprep.subr.bf16.mxu0 0
  %332 = vmatpush1.bf16.msra.mxu0 %v311
  %333 = vmatprep.subr.bf16.mxu0 0
  %334 = vmatpush1.bf16.msra.mxu0 %v312
  %335 = vmatprep.subr.bf16.mxu0 0
  %336 = vmatpush1.bf16.msra.mxu0 %v313
  %337 = vmatprep.subr.bf16.mxu0 0
  %338 = vmatpush1.bf16.msra.mxu0 %v314
  %339 = vmatprep.subr.bf16.mxu0 0
  %340 = vmatpush1.bf16.msra.mxu0 0
  %341 = vmatprep.subr.bf16.mxu0 0
  %342 = vmatpush1.bf16.msra.mxu0 0
  %343 = vmatprep.subr.bf16.mxu0 0
  %344 = vmatpush1.bf16.msra.mxu0 0
  %345 = vmatprep.subr.bf16.mxu0 0
  %346 = vmatpush1.bf16.msra.mxu0 0
  %347 = vmatprep.subr.bf16.mxu0 0
  %348 = vmatpush1.bf16.msra.mxu0 0
  %349 = vmatprep.subr.bf16.mxu0 0
  %350 = vmatpush1.bf16.msra.mxu0 0
  %351 = vmatprep.subr.bf16.mxu0 0
  %352 = vmatpush1.bf16.msra.mxu0 0
  %353 = vmatprep.subr.bf16.mxu0 0
  %354 = vmatpush1.bf16.msra.mxu0 0
  %355 = vmatprep.mubr.bf16.mxu0 0
  %356 = vmatmul.mubr.bf16.gmra.mrb[0].mxu0 %v43
  %v357 = vpop.f32.mrb[0].mxu0
  %v358 = vadd.f32 0.0, %v357
  %v359 = vpop.f32.mrb[0].mxu0
  %v360 = vpop.f32.mrb[0].mxu0
  %v361 = vadd.f32 0.0, %v360
  %v362 = vpop.f32.mrb[0].mxu0
  %363 = vdwg.mxu0
  %v364 = vadd.f32 %v256, %v358
  %v365 = vadd.f32 %v257, %v361
  %s366 = scalar_lea.vmem %s2, 128
  %v367 = vld [vmem:[%s366] sm:$0xf]
  %v368 = vld [vmem:[%s366 + $0x4] sm:$0xf]
  %v369 = vld [vmem:[%s366 + $0x8] sm:$0xf]
  %v370 = vld [vmem:[%s366 + $0xc] sm:$0xf]
  %v371 = vld [vmem:[%s366 + $0x10] sm:$0xf]
  %v372 = vld [vmem:[%s366 + $0x14] sm:$0xf]
  %v373 = vld [vmem:[%s366 + $0x18] sm:$0xf]
  %v374 = vld [vmem:[%s366 + $0x1c] sm:$0xf]
  %v375 = vld [vmem:[%s366 + $0x20] sm:$0xf]
  %v376 = vld [vmem:[%s366 + $0x24] sm:$0xf]
  %v377 = vld [vmem:[%s366 + $0x28] sm:$0xf]
  %v378 = vld [vmem:[%s366 + $0x2c] sm:$0xf]
  %v379 = vld [vmem:[%s366 + $0x30] sm:$0xf]
  %v380 = vld [vmem:[%s366 + $0x34] sm:$0xf]
  %v381 = vld [vmem:[%s366 + $0x38] sm:$0xf]
  %v382 = vld [vmem:[%s366 + $0x3c] sm:$0xf]
  %v399 = vunpack.c.l.b16 %v367
  %v400 = vunpack.c.l.b16 %v368
  %v401 = vunpack.c.l.b16 %v369
  %v402 = vunpack.c.l.b16 %v370
  %v403 = vunpack.c.l.b16 %v371
  %v404 = vunpack.c.l.b16 %v372
  %v405 = vunpack.c.l.b16 %v373
  %v406 = vunpack.c.l.b16 %v374
  %v407 = vunpack.c.l.b16 %v375
  %v408 = vunpack.c.l.b16 %v376
  %v409 = vunpack.c.l.b16 %v377
  %v410 = vunpack.c.l.b16 %v378
  %v411 = vunpack.c.l.b16 %v379
  %v412 = vunpack.c.l.b16 %v380
  %v413 = vunpack.c.l.b16 %v381
  %v414 = vunpack.c.l.b16 %v382
  %v415 = vpack.c.b16 %v400, %v399
  %v416 = vpack.c.b16 %v402, %v401
  %v417 = vpack.c.b16 %v404, %v403
  %v418 = vpack.c.b16 %v406, %v405
  %v419 = vpack.c.b16 %v408, %v407
  %v420 = vpack.c.b16 %v410, %v409
  %v421 = vpack.c.b16 %v412, %v411
  %v422 = vpack.c.b16 %v414, %v413
  %431 = vmatprep.subr.bf16.mxu0 0
  %432 = vmatpush1.bf16.msra.mxu0 %v415
  %433 = vmatprep.subr.bf16.mxu0 0
  %434 = vmatpush1.bf16.msra.mxu0 %v416
  %435 = vmatprep.subr.bf16.mxu0 0
  %436 = vmatpush1.bf16.msra.mxu0 %v417
  %437 = vmatprep.subr.bf16.mxu0 0
  %438 = vmatpush1.bf16.msra.mxu0 %v418
  %439 = vmatprep.subr.bf16.mxu0 0
  %440 = vmatpush1.bf16.msra.mxu0 %v419
  %441 = vmatprep.subr.bf16.mxu0 0
  %442 = vmatpush1.bf16.msra.mxu0 %v420
  %443 = vmatprep.subr.bf16.mxu0 0
  %444 = vmatpush1.bf16.msra.mxu0 %v421
  %445 = vmatprep.subr.bf16.mxu0 0
  %446 = vmatpush1.bf16.msra.mxu0 %v422
  %447 = vmatprep.subr.bf16.mxu0 0
  %448 = vmatpush1.bf16.msra.mxu0 0
  %449 = vmatprep.subr.bf16.mxu0 0
  %450 = vmatpush1.bf16.msra.mxu0 0
  %451 = vmatprep.subr.bf16.mxu0 0
  %452 = vmatpush1.bf16.msra.mxu0 0
  %453 = vmatprep.subr.bf16.mxu0 0
  %454 = vmatpush1.bf16.msra.mxu0 0
  %455 = vmatprep.subr.bf16.mxu0 0
  %456 = vmatpush1.bf16.msra.mxu0 0
  %457 = vmatprep.subr.bf16.mxu0 0
  %458 = vmatpush1.bf16.msra.mxu0 0
  %459 = vmatprep.subr.bf16.mxu0 0
  %460 = vmatpush1.bf16.msra.mxu0 0
  %461 = vmatprep.subr.bf16.mxu0 0
  %462 = vmatpush1.bf16.msra.mxu0 0
  %463 = vmatprep.mubr.bf16.mxu0 0
  %464 = vmatmul.mubr.bf16.gmra.mrb[0].mxu0 %v143
  %v465 = vpop.f32.mrb[0].mxu0
  %v466 = vadd.f32 0.0, %v465
  %v467 = vpop.f32.mrb[0].mxu0
  %v468 = vpop.f32.mrb[0].mxu0
  %v469 = vadd.f32 0.0, %v468
  %v470 = vpop.f32.mrb[0].mxu0
  %471 = vdwg.mxu0
  %v472 = vadd.f32 %v364, %v466
  %v473 = vadd.f32 %v365, %v469
  %v474 = vmax.f32 %v472, 0.0
  %v475 = vmax.f32 %v473, 0.0
  %v476 = vpack.c.bf16 %v475, %v474
  %477 = vmatprep.subr.bf16.mxu0 0
  %478 = vmatpush1.bf16.msra.mxu0 %v476
  %479 = vmatprep.subr.bf16.mxu0 0
  %480 = vmatpush1.bf16.msra.mxu0 0
  %481 = vmatprep.subr.bf16.mxu0 0
  %482 = vmatpush1.bf16.msra.mxu0 0
  %483 = vmatprep.subr.bf16.mxu0 0
  %484 = vmatpush1.bf16.msra.mxu0 0
  %485 = vmatprep.subr.bf16.mxu0 0
  %486 = vmatpush1.bf16.msra.mxu0 0
  %487 = vmatprep.subr.bf16.mxu0 0
  %488 = vmatpush1.bf16.msra.mxu0 0
  %489 = vmatprep.subr.bf16.mxu0 0
  %490 = vmatpush1.bf16.msra.mxu0 0
  %491 = vmatprep.subr.bf16.mxu0 0
  %492 = vmatpush1.bf16.msra.mxu0 0
  %493 = vmatprep.subr.bf16.mxu0 0
  %494 = vmatpush1.bf16.msra.mxu0 0
  %495 = vmatprep.subr.bf16.mxu0 0
  %496 = vmatpush1.bf16.msra.mxu0 0
  %497 = vmatprep.subr.bf16.mxu0 0
  %498 = vmatpush1.bf16.msra.mxu0 0
  %499 = vmatprep.subr.bf16.mxu0 0
  %500 = vmatpush1.bf16.msra.mxu0 0
  %501 = vmatprep.subr.bf16.mxu0 0
  %502 = vmatpush1.bf16.msra.mxu0 0
  %503 = vmatprep.subr.bf16.mxu0 0
  %504 = vmatpush1.bf16.msra.mxu0 0
  %505 = vmatprep.subr.bf16.mxu0 0
  %506 = vmatpush1.bf16.msra.mxu0 0
  %507 = vmatprep.subr.bf16.mxu0 0
  %508 = vmatpush1.bf16.msra.mxu0 0
  %509 = vmatprep.mubr.bf16.mxu0 0
  %510 = vmatmul.mubr.bf16.gmra.mrb[0].mxu0 %v47
  %v511 = vpop.f32.mrb[0].mxu0
  %v512 = vadd.f32 0.0, %v511
  %v513 = vpop.f32.mrb[0].mxu0
  %v514 = vpop.f32.mrb[0].mxu0
  %v515 = vadd.f32 0.0, %v514
  %v516 = vpop.f32.mrb[0].mxu0
  %517 = vdwg.mxu0
  %v518 = vpack.c.bf16 %v515, %v512
  %519 = vmatprep.subr.bf16.mxu0 0
  %520 = vmatpush1.bf16.msra.mxu0 %v476
  %521 = vmatprep.subr.bf16.mxu0 0
  %522 = vmatpush1.bf16.msra.mxu0 0
  %523 = vmatprep.subr.bf16.mxu0 0
  %524 = vmatpush1.bf16.msra.mxu0 0
  %525 = vmatprep.subr.bf16.mxu0 0
  %526 = vmatpush1.bf16.msra.mxu0 0
  %527 = vmatprep.subr.bf16.mxu0 0
  %528 = vmatpush1.bf16.msra.mxu0 0
  %529 = vmatprep.subr.bf16.mxu0 0
  %530 = vmatpush1.bf16.msra.mxu0 0
  %531 = vmatprep.subr.bf16.mxu0 0
  %532 = vmatpush1.bf16.msra.mxu0 0
  %533 = vmatprep.subr.bf16.mxu0 0
  %534 = vmatpush1.bf16.msra.mxu0 0
  %535 = vmatprep.subr.bf16.mxu0 0
  %536 = vmatpush1.bf16.msra.mxu0 0
  %537 = vmatprep.subr.bf16.mxu0 0
  %538 = vmatpush1.bf16.msra.mxu0 0
  %539 = vmatprep.subr.bf16.mxu0 0
  %540 = vmatpush1.bf16.msra.mxu0 0
  %541 = vmatprep.subr.bf16.mxu0 0
  %542 = vmatpush1.bf16.msra.mxu0 0
  %543 = vmatprep.subr.bf16.mxu0 0
  %544 = vmatpush1.bf16.msra.mxu0 0
  %545 = vmatprep.subr.bf16.mxu0 0
  %546 = vmatpush1.bf16.msra.mxu0 0
  %547 = vmatprep.subr.bf16.mxu0 0
  %548 = vmatpush1.bf16.msra.mxu0 0
  %549 = vmatprep.subr.bf16.mxu0 0
  %550 = vmatpush1.bf16.msra.mxu0 0
  %551 = vmatprep.mubr.bf16.mxu0 0
  %552 = vmatmul.mubr.bf16.gmra.mrb[0].mxu0 %v100
  %v553 = vpop.f32.mrb[0].mxu0
  %v554 = vadd.f32 0.0, %v553
  %v555 = vpop.f32.mrb[0].mxu0
  %v556 = vpop.f32.mrb[0].mxu0
  %v557 = vadd.f32 0.0, %v556
  %v558 = vpop.f32.mrb[0].mxu0
  %559 = vdwg.mxu0
  %v560 = vpack.c.bf16 %v557, %v554
  %v561 = vld [vmem:[%s5] sm:$0x1]
  %v563 = vlaneseq
  %v564 = vshrl.u32 %v563, 7
  %v565 = vsub.s32 0, %v564
  %v566 = vrot.slane %v561, %v565
  %v568 = vld [vmem:[%s4] sm:$0xf]
  %v569 = vld [vmem:[%s4 + $0x4] sm:$0xf]
  %v570 = vld [vmem:[%s4 + $0x8] sm:$0xf]
  %v571 = vld [vmem:[%s4 + $0xc] sm:$0xf]
  %v572 = vld [vmem:[%s4 + $0x10] sm:$0xf]
  %v573 = vld [vmem:[%s4 + $0x14] sm:$0xf]
  %v574 = vld [vmem:[%s4 + $0x18] sm:$0xf]
  %v575 = vld [vmem:[%s4 + $0x1c] sm:$0xf]
  %v584 = vunpack.c.l.b16 %v568
  %v585 = vunpack.c.l.b16 %v569
  %v586 = vunpack.c.l.b16 %v570
  %v587 = vunpack.c.l.b16 %v571
  %v588 = vunpack.c.l.b16 %v572
  %v589 = vunpack.c.l.b16 %v573
  %v590 = vunpack.c.l.b16 %v574
  %v591 = vunpack.c.l.b16 %v575
  %v592 = vpack.c.b16 %v585, %v584
  %v593 = vpack.c.b16 %v587, %v586
  %v594 = vpack.c.b16 %v589, %v588
  %v595 = vpack.c.b16 %v591, %v590
  %vm600 = vcmask 523264
  %v602 = vsel %vm600, %v518, 0
  %604 = vmatprep.subr.bf16.mxu0 0
  %605 = vmatpush1.bf16.msra.mxu0 %v592
  %606 = vmatprep.subr.bf16.mxu0 0
  %607 = vmatpush1.bf16.msra.mxu0 %v593
  %608 = vmatprep.subr.bf16.mxu0 0
  %609 = vmatpush1.bf16.msra.mxu0 %v594
  %610 = vmatprep.subr.bf16.mxu0 0
  %611 = vmatpush1.bf16.msra.mxu0 %v595
  %612 = vmatprep.subr.bf16.mxu0 0
  %613 = vmatpush1.bf16.msra.mxu0 0
  %614 = vmatprep.subr.bf16.mxu0 0
  %615 = vmatpush1.bf16.msra.mxu0 0
  %616 = vmatprep.subr.bf16.mxu0 0
  %617 = vmatpush1.bf16.msra.mxu0 0
  %618 = vmatprep.subr.bf16.mxu0 0
  %619 = vmatpush1.bf16.msra.mxu0 0
  %620 = vmatprep.subr.bf16.mxu0 0
  %621 = vmatpush1.bf16.msra.mxu0 0
  %622 = vmatprep.subr.bf16.mxu0 0
  %623 = vmatpush1.bf16.msra.mxu0 0
  %624 = vmatprep.subr.bf16.mxu0 0
  %625 = vmatpush1.bf16.msra.mxu0 0
  %626 = vmatprep.subr.bf16.mxu0 0
  %627 = vmatpush1.bf16.msra.mxu0 0
  %628 = vmatprep.subr.bf16.mxu0 0
  %629 = vmatpush1.bf16.msra.mxu0 0
  %630 = vmatprep.subr.bf16.mxu0 0
  %631 = vmatpush1.bf16.msra.mxu0 0
  %632 = vmatprep.subr.bf16.mxu0 0
  %633 = vmatpush1.bf16.msra.mxu0 0
  %634 = vmatprep.subr.bf16.mxu0 0
  %635 = vmatpush1.bf16.msra.mxu0 0
  %636 = vmatprep.mubr.bf16.mxu0 0
  %637 = vmatmul.mubr.bf16.gmra.mrb[0].mxu0 %v602
  %v638 = vpop.f32.mrb[0].mxu0
  %v639 = vadd.f32 0.0, %v638
  %v640 = vpop.f32.mrb[0].mxu0
  %v641 = vpop.f32.mrb[0].mxu0
  %v642 = vadd.f32 0.0, %v641
  %v643 = vpop.f32.mrb[0].mxu0
  %644 = vdwg.mxu0
  %v645 = vadd.f32 %v566, %v639
  %v646 = vadd.f32 %v566, %v642
  %s647 = scalar_lea.vmem %s4, 32
  %v648 = vld [vmem:[%s647] sm:$0xf]
  %v649 = vld [vmem:[%s647 + $0x4] sm:$0xf]
  %v650 = vld [vmem:[%s647 + $0x8] sm:$0xf]
  %v651 = vld [vmem:[%s647 + $0xc] sm:$0xf]
  %v652 = vld [vmem:[%s647 + $0x10] sm:$0xf]
  %v653 = vld [vmem:[%s647 + $0x14] sm:$0xf]
  %v654 = vld [vmem:[%s647 + $0x18] sm:$0xf]
  %v655 = vld [vmem:[%s647 + $0x1c] sm:$0xf]
  %v664 = vunpack.c.l.b16 %v648
  %v665 = vunpack.c.l.b16 %v649
  %v666 = vunpack.c.l.b16 %v650
  %v667 = vunpack.c.l.b16 %v651
  %v668 = vunpack.c.l.b16 %v652
  %v669 = vunpack.c.l.b16 %v653
  %v670 = vunpack.c.l.b16 %v654
  %v671 = vunpack.c.l.b16 %v655
  %v672 = vpack.c.b16 %v665, %v664
  %v673 = vpack.c.b16 %v667, %v666
  %v674 = vpack.c.b16 %v669, %v668
  %v675 = vpack.c.b16 %v671, %v670
  %v681 = vsel %vm600, %v476, 0
  %683 = vmatprep.subr.bf16.mxu0 0
  %684 = vmatpush1.bf16.msra.mxu0 %v672
  %685 = vmatprep.subr.bf16.mxu0 0
  %686 = vmatpush1.bf16.msra.mxu0 %v673
  %687 = vmatprep.subr.bf16.mxu0 0
  %688 = vmatpush1.bf16.msra.mxu0 %v674
  %689 = vmatprep.subr.bf16.mxu0 0
  %690 = vmatpush1.bf16.msra.mxu0 %v675
  %691 = vmatprep.subr.bf16.mxu0 0
  %692 = vmatpush1.bf16.msra.mxu0 0
  %693 = vmatprep.subr.bf16.mxu0 0
  %694 = vmatpush1.bf16.msra.mxu0 0
  %695 = vmatprep.subr.bf16.mxu0 0
  %696 = vmatpush1.bf16.msra.mxu0 0
  %697 = vmatprep.subr.bf16.mxu0 0
  %698 = vmatpush1.bf16.msra.mxu0 0
  %699 = vmatprep.subr.bf16.mxu0 0
  %700 = vmatpush1.bf16.msra.mxu0 0
  %701 = vmatprep.subr.bf16.mxu0 0
  %702 = vmatpush1.bf16.msra.mxu0 0
  %703 = vmatprep.subr.bf16.mxu0 0
  %704 = vmatpush1.bf16.msra.mxu0 0
  %705 = vmatprep.subr.bf16.mxu0 0
  %706 = vmatpush1.bf16.msra.mxu0 0
  %707 = vmatprep.subr.bf16.mxu0 0
  %708 = vmatpush1.bf16.msra.mxu0 0
  %709 = vmatprep.subr.bf16.mxu0 0
  %710 = vmatpush1.bf16.msra.mxu0 0
  %711 = vmatprep.subr.bf16.mxu0 0
  %712 = vmatpush1.bf16.msra.mxu0 0
  %713 = vmatprep.subr.bf16.mxu0 0
  %714 = vmatpush1.bf16.msra.mxu0 0
  %715 = vmatprep.mubr.bf16.mxu0 0
  %716 = vmatmul.mubr.bf16.gmra.mrb[0].mxu0 %v681
  %v717 = vpop.f32.mrb[0].mxu0
  %v718 = vadd.f32 0.0, %v717
  %v719 = vpop.f32.mrb[0].mxu0
  %v720 = vpop.f32.mrb[0].mxu0
  %v721 = vadd.f32 0.0, %v720
  %v722 = vpop.f32.mrb[0].mxu0
  %723 = vdwg.mxu0
  %v724 = vadd.f32 %v645, %v718
  %v725 = vadd.f32 %v646, %v721
  %s726 = scalar_lea.vmem %s4, 64
  %v727 = vld [vmem:[%s726] sm:$0xf]
  %v728 = vld [vmem:[%s726 + $0x4] sm:$0xf]
  %v729 = vld [vmem:[%s726 + $0x8] sm:$0xf]
  %v730 = vld [vmem:[%s726 + $0xc] sm:$0xf]
  %v731 = vld [vmem:[%s726 + $0x10] sm:$0xf]
  %v732 = vld [vmem:[%s726 + $0x14] sm:$0xf]
  %v733 = vld [vmem:[%s726 + $0x18] sm:$0xf]
  %v734 = vld [vmem:[%s726 + $0x1c] sm:$0xf]
  %v743 = vunpack.c.l.b16 %v727
  %v744 = vunpack.c.l.b16 %v728
  %v745 = vunpack.c.l.b16 %v729
  %v746 = vunpack.c.l.b16 %v730
  %v747 = vunpack.c.l.b16 %v731
  %v748 = vunpack.c.l.b16 %v732
  %v749 = vunpack.c.l.b16 %v733
  %v750 = vunpack.c.l.b16 %v734
  %v751 = vpack.c.b16 %v744, %v743
  %v752 = vpack.c.b16 %v746, %v745
  %v753 = vpack.c.b16 %v748, %v747
  %v754 = vpack.c.b16 %v750, %v749
  %v760 = vsel %vm600, %v560, 0
  %762 = vmatprep.subr.bf16.mxu0 0
  %763 = vmatpush1.bf16.msra.mxu0 %v751
  %764 = vmatprep.subr.bf16.mxu0 0
  %765 = vmatpush1.bf16.msra.mxu0 %v752
  %766 = vmatprep.subr.bf16.mxu0 0
  %767 = vmatpush1.bf16.msra.mxu0 %v753
  %768 = vmatprep.subr.bf16.mxu0 0
  %769 = vmatpush1.bf16.msra.mxu0 %v754
  %770 = vmatprep.subr.bf16.mxu0 0
  %771 = vmatpush1.bf16.msra.mxu0 0
  %772 = vmatprep.subr.bf16.mxu0 0
  %773 = vmatpush1.bf16.msra.mxu0 0
  %774 = vmatprep.subr.bf16.mxu0 0
  %775 = vmatpush1.bf16.msra.mxu0 0
  %776 = vmatprep.subr.bf16.mxu0 0
  %777 = vmatpush1.bf16.msra.mxu0 0
  %778 = vmatprep.subr.bf16.mxu0 0
  %779 = vmatpush1.bf16.msra.mxu0 0
  %780 = vmatprep.subr.bf16.mxu0 0
  %781 = vmatpush1.bf16.msra.mxu0 0
  %782 = vmatprep.subr.bf16.mxu0 0
  %783 = vmatpush1.bf16.msra.mxu0 0
  %784 = vmatprep.subr.bf16.mxu0 0
  %785 = vmatpush1.bf16.msra.mxu0 0
  %786 = vmatprep.subr.bf16.mxu0 0
  %787 = vmatpush1.bf16.msra.mxu0 0
  %788 = vmatprep.subr.bf16.mxu0 0
  %789 = vmatpush1.bf16.msra.mxu0 0
  %790 = vmatprep.subr.bf16.mxu0 0
  %791 = vmatpush1.bf16.msra.mxu0 0
  %792 = vmatprep.subr.bf16.mxu0 0
  %793 = vmatpush1.bf16.msra.mxu0 0
  %794 = vmatprep.mubr.bf16.mxu0 0
  %795 = vmatmul.mubr.bf16.gmra.mrb[0].mxu0 %v760
  %v796 = vpop.f32.mrb[0].mxu0
  %v797 = vadd.f32 0.0, %v796
  %v798 = vpop.f32.mrb[0].mxu0
  %v799 = vpop.f32.mrb[0].mxu0
  %v800 = vadd.f32 0.0, %v799
  %v801 = vpop.f32.mrb[0].mxu0
  %802 = vdwg.mxu0
  %v803 = vadd.f32 %v724, %v797
  %v804 = vadd.f32 %v725, %v800
  %v805 = vmax.f32 %v803, 0.0
  %v806 = vmax.f32 %v804, 0.0
  %v807 = vpack.c.bf16 %v806, %v805
  %808 = vmatprep.subr.bf16.mxu0 0
  %809 = vmatpush1.bf16.msra.mxu0 %v807
  %810 = vmatprep.subr.bf16.mxu0 0
  %811 = vmatpush1.bf16.msra.mxu0 0
  %812 = vmatprep.subr.bf16.mxu0 0
  %813 = vmatpush1.bf16.msra.mxu0 0
  %814 = vmatprep.subr.bf16.mxu0 0
  %815 = vmatpush1.bf16.msra.mxu0 0
  %816 = vmatprep.subr.bf16.mxu0 0
  %817 = vmatpush1.bf16.msra.mxu0 0
  %818 = vmatprep.subr.bf16.mxu0 0
  %819 = vmatpush1.bf16.msra.mxu0 0
  %820 = vmatprep.subr.bf16.mxu0 0
  %821 = vmatpush1.bf16.msra.mxu0 0
  %822 = vmatprep.subr.bf16.mxu0 0
  %823 = vmatpush1.bf16.msra.mxu0 0
  %824 = vmatprep.subr.bf16.mxu0 0
  %825 = vmatpush1.bf16.msra.mxu0 0
  %826 = vmatprep.subr.bf16.mxu0 0
  %827 = vmatpush1.bf16.msra.mxu0 0
  %828 = vmatprep.subr.bf16.mxu0 0
  %829 = vmatpush1.bf16.msra.mxu0 0
  %830 = vmatprep.subr.bf16.mxu0 0
  %831 = vmatpush1.bf16.msra.mxu0 0
  %832 = vmatprep.subr.bf16.mxu0 0
  %833 = vmatpush1.bf16.msra.mxu0 0
  %834 = vmatprep.subr.bf16.mxu0 0
  %835 = vmatpush1.bf16.msra.mxu0 0
  %836 = vmatprep.subr.bf16.mxu0 0
  %837 = vmatpush1.bf16.msra.mxu0 0
  %838 = vmatprep.subr.bf16.mxu0 0
  %839 = vmatpush1.bf16.msra.mxu0 0
  %840 = vmatprep.mubr.bf16.mxu0 0
  %841 = vmatmul.mubr.bf16.gmra.mrb[0].mxu0 %v47
  %v842 = vpop.f32.mrb[0].mxu0
  %v843 = vadd.f32 0.0, %v842
  %v844 = vpop.f32.mrb[0].mxu0
  %v845 = vpop.f32.mrb[0].mxu0
  %v846 = vadd.f32 0.0, %v845
  %v847 = vpop.f32.mrb[0].mxu0
  %848 = vdwg.mxu0
  %v849 = vpack.c.bf16 %v846, %v843
  %850 = vmatprep.subr.bf16.mxu0 0
  %851 = vmatpush1.bf16.msra.mxu0 %v807
  %852 = vmatprep.subr.bf16.mxu0 0
  %853 = vmatpush1.bf16.msra.mxu0 0
  %854 = vmatprep.subr.bf16.mxu0 0
  %855 = vmatpush1.bf16.msra.mxu0 0
  %856 = vmatprep.subr.bf16.mxu0 0
  %857 = vmatpush1.bf16.msra.mxu0 0
  %858 = vmatprep.subr.bf16.mxu0 0
  %859 = vmatpush1.bf16.msra.mxu0 0
  %860 = vmatprep.subr.bf16.mxu0 0
  %861 = vmatpush1.bf16.msra.mxu0 0
  %862 = vmatprep.subr.bf16.mxu0 0
  %863 = vmatpush1.bf16.msra.mxu0 0
  %864 = vmatprep.subr.bf16.mxu0 0
  %865 = vmatpush1.bf16.msra.mxu0 0
  %866 = vmatprep.subr.bf16.mxu0 0
  %867 = vmatpush1.bf16.msra.mxu0 0
  %868 = vmatprep.subr.bf16.mxu0 0
  %869 = vmatpush1.bf16.msra.mxu0 0
  %870 = vmatprep.subr.bf16.mxu0 0
  %871 = vmatpush1.bf16.msra.mxu0 0
  %872 = vmatprep.subr.bf16.mxu0 0
  %873 = vmatpush1.bf16.msra.mxu0 0
  %874 = vmatprep.subr.bf16.mxu0 0
  %875 = vmatpush1.bf16.msra.mxu0 0
  %876 = vmatprep.subr.bf16.mxu0 0
  %877 = vmatpush1.bf16.msra.mxu0 0
  %878 = vmatprep.subr.bf16.mxu0 0
  %879 = vmatpush1.bf16.msra.mxu0 0
  %880 = vmatprep.subr.bf16.mxu0 0
  %881 = vmatpush1.bf16.msra.mxu0 0
  %882 = vmatprep.mubr.bf16.mxu0 0
  %883 = vmatmul.mubr.bf16.gmra.mrb[0].mxu0 %v100
  %v884 = vpop.f32.mrb[0].mxu0
  %v885 = vadd.f32 0.0, %v884
  %v886 = vpop.f32.mrb[0].mxu0
  %v887 = vpop.f32.mrb[0].mxu0
  %v888 = vadd.f32 0.0, %v887
  %v889 = vpop.f32.mrb[0].mxu0
  %890 = vdwg.mxu0
  %v891 = vpack.c.bf16 %v888, %v885
  %v892 = vld [vmem:[%s7] sm:$0xf]
  %v894 = vlaneseq
  %v895 = vshrl.u32 %v894, 7
  %v896 = vsub.s32 0, %v895
  %v897 = vrot.slane %v892, %v896
  %v898 = vlaneseq
  %v899 = vshrl.u32 %v898, 7
  %v900 = vsub.s32 1, %v899
  %v901 = vrot.slane %v892, %v900
  %v902 = vlaneseq
  %v903 = vshrl.u32 %v902, 7
  %v904 = vsub.s32 2, %v903
  %v905 = vrot.slane %v892, %v904
  %v906 = vlaneseq
  %v907 = vshrl.u32 %v906, 7
  %v908 = vsub.s32 3, %v907
  %v909 = vrot.slane %v892, %v908
  %v914 = vld [vmem:[%s6] sm:$0xff]
  %v915 = vld [vmem:[%s6 + $0x8] sm:$0xff]
  %v916 = vld [vmem:[%s6 + $0x10] sm:$0xff]
  %v917 = vld [vmem:[%s6 + $0x18] sm:$0xff]
  %v918 = vld [vmem:[%s6 + $0x20] sm:$0xff]
  %v919 = vld [vmem:[%s6 + $0x28] sm:$0xff]
  %v920 = vld [vmem:[%s6 + $0x30] sm:$0xff]
  %v921 = vld [vmem:[%s6 + $0x38] sm:$0xff]
  %v930 = vunpack.c.l.b16 %v914
  %v931 = vunpack.c.h.b16 %v914
  %v932 = vunpack.c.l.b16 %v915
  %v933 = vunpack.c.h.b16 %v915
  %v934 = vunpack.c.l.b16 %v916
  %v935 = vunpack.c.h.b16 %v916
  %v936 = vunpack.c.l.b16 %v917
  %v937 = vunpack.c.h.b16 %v917
  %v938 = vunpack.c.l.b16 %v918
  %v939 = vunpack.c.h.b16 %v918
  %v940 = vunpack.c.l.b16 %v919
  %v941 = vunpack.c.h.b16 %v919
  %v942 = vunpack.c.l.b16 %v920
  %v943 = vunpack.c.h.b16 %v920
  %v944 = vunpack.c.l.b16 %v921
  %v945 = vunpack.c.h.b16 %v921
  %v946 = vpack.c.b16 %v934, %v930
  %v947 = vpack.c.b16 %v935, %v931
  %v948 = vpack.c.b16 %v936, %v932
  %v949 = vpack.c.b16 %v937, %v933
  %v950 = vpack.c.b16 %v942, %v938
  %v951 = vpack.c.b16 %v943, %v939
  %v952 = vpack.c.b16 %v944, %v940
  %v953 = vpack.c.b16 %v945, %v941
  %vm962 = vcmask 261120
  %v964 = vsel %vm962, %v849, 0
  %966 = vmatprep.subr.bf16.mxu0 %v947
  %967 = vmatpush1.bf16.msra.mxu0 %v946
  %968 = vmatprep.subr.bf16.mxu0 %v951
  %969 = vmatpush1.bf16.msra.mxu0 %v950
  %970 = vmatprep.subr.bf16.mxu0 0
  %971 = vmatpush1.bf16.msra.mxu0 0
  %972 = vmatprep.subr.bf16.mxu0 0
  %973 = vmatpush1.bf16.msra.mxu0 0
  %974 = vmatprep.subr.bf16.mxu0 0
  %975 = vmatpush1.bf16.msra.mxu0 0
  %976 = vmatprep.subr.bf16.mxu0 0
  %977 = vmatpush1.bf16.msra.mxu0 0
  %978 = vmatprep.subr.bf16.mxu0 0
  %979 = vmatpush1.bf16.msra.mxu0 0
  %980 = vmatprep.subr.bf16.mxu0 0
  %981 = vmatpush1.bf16.msra.mxu0 0
  %982 = vmatprep.subr.bf16.mxu0 0
  %983 = vmatpush1.bf16.msra.mxu0 0
  %984 = vmatprep.subr.bf16.mxu0 0
  %985 = vmatpush1.bf16.msra.mxu0 0
  %986 = vmatprep.subr.bf16.mxu0 0
  %987 = vmatpush1.bf16.msra.mxu0 0
  %988 = vmatprep.subr.bf16.mxu0 0
  %989 = vmatpush1.bf16.msra.mxu0 0
  %990 = vmatprep.subr.bf16.mxu0 0
  %991 = vmatpush1.bf16.msra.mxu0 0
  %992 = vmatprep.subr.bf16.mxu0 0
  %993 = vmatpush1.bf16.msra.mxu0 0
  %994 = vmatprep.subr.bf16.mxu0 0
  %995 = vmatpush1.bf16.msra.mxu0 0
  %996 = vmatprep.subr.bf16.mxu0 0
  %997 = vmatpush1.bf16.msra.mxu0 0
  %998 = vmatprep.mubr.bf16.mxu0 0
  %999 = vmatmul.mubr.bf16.gmra.mrb[0].mxu0 %v964
  %v1000 = vpop.f32.mrb[0].mxu0
  %v1001 = vadd.f32 0.0, %v1000
  %v1002 = vpop.f32.mrb[0].mxu0
  %v1003 = vadd.f32 0.0, %v1002
  %v1004 = vpop.f32.mrb[0].mxu0
  %v1005 = vadd.f32 0.0, %v1004
  %v1006 = vpop.f32.mrb[0].mxu0
  %v1007 = vadd.f32 0.0, %v1006
  %1008 = vdwg.mxu0
  %1009 = vmatprep.subr.bf16.mxu0 %v949
  %1010 = vmatpush1.bf16.msra.mxu0 %v948
  %1011 = vmatprep.subr.bf16.mxu0 %v953
  %1012 = vmatpush1.bf16.msra.mxu0 %v952
  %1013 = vmatprep.subr.bf16.mxu0 0
  %1014 = vmatpush1.bf16.msra.mxu0 0
  %1015 = vmatprep.subr.bf16.mxu0 0
  %1016 = vmatpush1.bf16.msra.mxu0 0
  %1017 = vmatprep.subr.bf16.mxu0 0
  %1018 = vmatpush1.bf16.msra.mxu0 0
  %1019 = vmatprep.subr.bf16.mxu0 0
  %1020 = vmatpush1.bf16.msra.mxu0 0
  %1021 = vmatprep.subr.bf16.mxu0 0
  %1022 = vmatpush1.bf16.msra.mxu0 0
  %1023 = vmatprep.subr.bf16.mxu0 0
  %1024 = vmatpush1.bf16.msra.mxu0 0
  %1025 = vmatprep.subr.bf16.mxu0 0
  %1026 = vmatpush1.bf16.msra.mxu0 0
  %1027 = vmatprep.subr.bf16.mxu0 0
  %1028 = vmatpush1.bf16.msra.mxu0 0
  %1029 = vmatprep.subr.bf16.mxu0 0
  %1030 = vmatpush1.bf16.msra.mxu0 0
  %1031 = vmatprep.subr.bf16.mxu0 0
  %1032 = vmatpush1.bf16.msra.mxu0 0
  %1033 = vmatprep.subr.bf16.mxu0 0
  %1034 = vmatpush1.bf16.msra.mxu0 0
  %1035 = vmatprep.subr.bf16.mxu0 0
  %1036 = vmatpush1.bf16.msra.mxu0 0
  %1037 = vmatprep.subr.bf16.mxu0 0
  %1038 = vmatpush1.bf16.msra.mxu0 0
  %1039 = vmatprep.subr.bf16.mxu0 0
  %1040 = vmatpush1.bf16.msra.mxu0 0
  %1041 = vmatprep.mubr.bf16.mxu0 0
  %1042 = vmatmul.mubr.bf16.gmra.mrb[0].mxu0 %v964
  %v1043 = vpop.f32.mrb[0].mxu0
  %v1044 = vadd.f32 0.0, %v1043
  %v1045 = vpop.f32.mrb[0].mxu0
  %v1046 = vadd.f32 0.0, %v1045
  %v1047 = vpop.f32.mrb[0].mxu0
  %v1048 = vadd.f32 0.0, %v1047
  %v1049 = vpop.f32.mrb[0].mxu0
  %v1050 = vadd.f32 0.0, %v1049
  %1051 = vdwg.mxu0
  %v1052 = vadd.f32 %v897, %v1001
  %v1053 = vadd.f32 %v901, %v1003
  %v1054 = vadd.f32 %v905, %v1044
  %v1055 = vadd.f32 %v909, %v1046
  %v1056 = vadd.f32 %v897, %v1005
  %v1057 = vadd.f32 %v901, %v1007
  %v1058 = vadd.f32 %v905, %v1048
  %v1059 = vadd.f32 %v909, %v1050
  %s1060 = scalar_lea.vmem %s6, 64
  %v1061 = vld [vmem:[%s1060] sm:$0xff]
  %v1062 = vld [vmem:[%s1060 + $0x8] sm:$0xff]
  %v1063 = vld [vmem:[%s1060 + $0x10] sm:$0xff]
  %v1064 = vld [vmem:[%s1060 + $0x18] sm:$0xff]
  %v1065 = vld [vmem:[%s1060 + $0x20] sm:$0xff]
  %v1066 = vld [vmem:[%s1060 + $0x28] sm:$0xff]
  %v1067 = vld [vmem:[%s1060 + $0x30] sm:$0xff]
  %v1068 = vld [vmem:[%s1060 + $0x38] sm:$0xff]
  %v1077 = vunpack.c.l.b16 %v1061
  %v1078 = vunpack.c.h.b16 %v1061
  %v1079 = vunpack.c.l.b16 %v1062
  %v1080 = vunpack.c.h.b16 %v1062
  %v1081 = vunpack.c.l.b16 %v1063
  %v1082 = vunpack.c.h.b16 %v1063
  %v1083 = vunpack.c.l.b16 %v1064
  %v1084 = vunpack.c.h.b16 %v1064
  %v1085 = vunpack.c.l.b16 %v1065
  %v1086 = vunpack.c.h.b16 %v1065
  %v1087 = vunpack.c.l.b16 %v1066
  %v1088 = vunpack.c.h.b16 %v1066
  %v1089 = vunpack.c.l.b16 %v1067
  %v1090 = vunpack.c.h.b16 %v1067
  %v1091 = vunpack.c.l.b16 %v1068
  %v1092 = vunpack.c.h.b16 %v1068
  %v1093 = vpack.c.b16 %v1081, %v1077
  %v1094 = vpack.c.b16 %v1082, %v1078
  %v1095 = vpack.c.b16 %v1083, %v1079
  %v1096 = vpack.c.b16 %v1084, %v1080
  %v1097 = vpack.c.b16 %v1089, %v1085
  %v1098 = vpack.c.b16 %v1090, %v1086
  %v1099 = vpack.c.b16 %v1091, %v1087
  %v1100 = vpack.c.b16 %v1092, %v1088
  %v1110 = vsel %vm962, %v807, 0
  %1112 = vmatprep.subr.bf16.mxu0 %v1094
  %1113 = vmatpush1.bf16.msra.mxu0 %v1093
  %1114 = vmatprep.subr.bf16.mxu0 %v1098
  %1115 = vmatpush1.bf16.msra.mxu0 %v1097
  %1116 = vmatprep.subr.bf16.mxu0 0
  %1117 = vmatpush1.bf16.msra.mxu0 0
  %1118 = vmatprep.subr.bf16.mxu0 0
  %1119 = vmatpush1.bf16.msra.mxu0 0
  %1120 = vmatprep.subr.bf16.mxu0 0
  %1121 = vmatpush1.bf16.msra.mxu0 0
  %1122 = vmatprep.subr.bf16.mxu0 0
  %1123 = vmatpush1.bf16.msra.mxu0 0
  %1124 = vmatprep.subr.bf16.mxu0 0
  %1125 = vmatpush1.bf16.msra.mxu0 0
  %1126 = vmatprep.subr.bf16.mxu0 0
  %1127 = vmatpush1.bf16.msra.mxu0 0
  %1128 = vmatprep.subr.bf16.mxu0 0
  %1129 = vmatpush1.bf16.msra.mxu0 0
  %1130 = vmatprep.subr.bf16.mxu0 0
  %1131 = vmatpush1.bf16.msra.mxu0 0
  %1132 = vmatprep.subr.bf16.mxu0 0
  %1133 = vmatpush1.bf16.msra.mxu0 0
  %1134 = vmatprep.subr.bf16.mxu0 0
  %1135 = vmatpush1.bf16.msra.mxu0 0
  %1136 = vmatprep.subr.bf16.mxu0 0
  %1137 = vmatpush1.bf16.msra.mxu0 0
  %1138 = vmatprep.subr.bf16.mxu0 0
  %1139 = vmatpush1.bf16.msra.mxu0 0
  %1140 = vmatprep.subr.bf16.mxu0 0
  %1141 = vmatpush1.bf16.msra.mxu0 0
  %1142 = vmatprep.subr.bf16.mxu0 0
  %1143 = vmatpush1.bf16.msra.mxu0 0
  %1144 = vmatprep.mubr.bf16.mxu0 0
  %1145 = vmatmul.mubr.bf16.gmra.mrb[0].mxu0 %v1110
  %v1146 = vpop.f32.mrb[0].mxu0
  %v1147 = vadd.f32 0.0, %v1146
  %v1148 = vpop.f32.mrb[0].mxu0
  %v1149 = vadd.f32 0.0, %v1148
  %v1150 = vpop.f32.mrb[0].mxu0
  %v1151 = vadd.f32 0.0, %v1150
  %v1152 = vpop.f32.mrb[0].mxu0
  %v1153 = vadd.f32 0.0, %v1152
  %1154 = vdwg.mxu0
  %1155 = vmatprep.subr.bf16.mxu0 %v1096
  %1156 = vmatpush1.bf16.msra.mxu0 %v1095
  %1157 = vmatprep.subr.bf16.mxu0 %v1100
  %1158 = vmatpush1.bf16.msra.mxu0 %v1099
  %1159 = vmatprep.subr.bf16.mxu0 0
  %1160 = vmatpush1.bf16.msra.mxu0 0
  %1161 = vmatprep.subr.bf16.mxu0 0
  %1162 = vmatpush1.bf16.msra.mxu0 0
  %1163 = vmatprep.subr.bf16.mxu0 0
  %1164 = vmatpush1.bf16.msra.mxu0 0
  %1165 = vmatprep.subr.bf16.mxu0 0
  %1166 = vmatpush1.bf16.msra.mxu0 0
  %1167 = vmatprep.subr.bf16.mxu0 0
  %1168 = vmatpush1.bf16.msra.mxu0 0
  %1169 = vmatprep.subr.bf16.mxu0 0
  %1170 = vmatpush1.bf16.msra.mxu0 0
  %1171 = vmatprep.subr.bf16.mxu0 0
  %1172 = vmatpush1.bf16.msra.mxu0 0
  %1173 = vmatprep.subr.bf16.mxu0 0
  %1174 = vmatpush1.bf16.msra.mxu0 0
  %1175 = vmatprep.subr.bf16.mxu0 0
  %1176 = vmatpush1.bf16.msra.mxu0 0
  %1177 = vmatprep.subr.bf16.mxu0 0
  %1178 = vmatpush1.bf16.msra.mxu0 0
  %1179 = vmatprep.subr.bf16.mxu0 0
  %1180 = vmatpush1.bf16.msra.mxu0 0
  %1181 = vmatprep.subr.bf16.mxu0 0
  %1182 = vmatpush1.bf16.msra.mxu0 0
  %1183 = vmatprep.subr.bf16.mxu0 0
  %1184 = vmatpush1.bf16.msra.mxu0 0
  %1185 = vmatprep.subr.bf16.mxu0 0
  %1186 = vmatpush1.bf16.msra.mxu0 0
  %1187 = vmatprep.mubr.bf16.mxu0 0
  %1188 = vmatmul.mubr.bf16.gmra.mrb[0].mxu0 %v1110
  %v1189 = vpop.f32.mrb[0].mxu0
  %v1190 = vadd.f32 0.0, %v1189
  %v1191 = vpop.f32.mrb[0].mxu0
  %v1192 = vadd.f32 0.0, %v1191
  %v1193 = vpop.f32.mrb[0].mxu0
  %v1194 = vadd.f32 0.0, %v1193
  %v1195 = vpop.f32.mrb[0].mxu0
  %v1196 = vadd.f32 0.0, %v1195
  %1197 = vdwg.mxu0
  %v1198 = vadd.f32 %v1052, %v1147
  %v1199 = vadd.f32 %v1053, %v1149
  %v1200 = vadd.f32 %v1054, %v1190
  %v1201 = vadd.f32 %v1055, %v1192
  %v1202 = vadd.f32 %v1056, %v1151
  %v1203 = vadd.f32 %v1057, %v1153
  %v1204 = vadd.f32 %v1058, %v1194
  %v1205 = vadd.f32 %v1059, %v1196
  %s1206 = scalar_lea.vmem %s6, 128
  %v1207 = vld [vmem:[%s1206] sm:$0xff]
  %v1208 = vld [vmem:[%s1206 + $0x8] sm:$0xff]
  %v1209 = vld [vmem:[%s1206 + $0x10] sm:$0xff]
  %v1210 = vld [vmem:[%s1206 + $0x18] sm:$0xff]
  %v1211 = vld [vmem:[%s1206 + $0x20] sm:$0xff]
  %v1212 = vld [vmem:[%s1206 + $0x28] sm:$0xff]
  %v1213 = vld [vmem:[%s1206 + $0x30] sm:$0xff]
  %v1214 = vld [vmem:[%s1206 + $0x38] sm:$0xff]
  %v1223 = vunpack.c.l.b16 %v1207
  %v1224 = vunpack.c.h.b16 %v1207
  %v1225 = vunpack.c.l.b16 %v1208
  %v1226 = vunpack.c.h.b16 %v1208
  %v1227 = vunpack.c.l.b16 %v1209
  %v1228 = vunpack.c.h.b16 %v1209
  %v1229 = vunpack.c.l.b16 %v1210
  %v1230 = vunpack.c.h.b16 %v1210
  %v1231 = vunpack.c.l.b16 %v1211
  %v1232 = vunpack.c.h.b16 %v1211
  %v1233 = vunpack.c.l.b16 %v1212
  %v1234 = vunpack.c.h.b16 %v1212
  %v1235 = vunpack.c.l.b16 %v1213
  %v1236 = vunpack.c.h.b16 %v1213
  %v1237 = vunpack.c.l.b16 %v1214
  %v1238 = vunpack.c.h.b16 %v1214
  %v1239 = vpack.c.b16 %v1227, %v1223
  %v1240 = vpack.c.b16 %v1228, %v1224
  %v1241 = vpack.c.b16 %v1229, %v1225
  %v1242 = vpack.c.b16 %v1230, %v1226
  %v1243 = vpack.c.b16 %v1235, %v1231
  %v1244 = vpack.c.b16 %v1236, %v1232
  %v1245 = vpack.c.b16 %v1237, %v1233
  %v1246 = vpack.c.b16 %v1238, %v1234
  %v1256 = vsel %vm962, %v891, 0
  %1258 = vmatprep.subr.bf16.mxu0 %v1240
  %1259 = vmatpush1.bf16.msra.mxu0 %v1239
  %1260 = vmatprep.subr.bf16.mxu0 %v1244
  %1261 = vmatpush1.bf16.msra.mxu0 %v1243
  %1262 = vmatprep.subr.bf16.mxu0 0
  %1263 = vmatpush1.bf16.msra.mxu0 0
  %1264 = vmatprep.subr.bf16.mxu0 0
  %1265 = vmatpush1.bf16.msra.mxu0 0
  %1266 = vmatprep.subr.bf16.mxu0 0
  %1267 = vmatpush1.bf16.msra.mxu0 0
  %1268 = vmatprep.subr.bf16.mxu0 0
  %1269 = vmatpush1.bf16.msra.mxu0 0
  %1270 = vmatprep.subr.bf16.mxu0 0
  %1271 = vmatpush1.bf16.msra.mxu0 0
  %1272 = vmatprep.subr.bf16.mxu0 0
  %1273 = vmatpush1.bf16.msra.mxu0 0
  %1274 = vmatprep.subr.bf16.mxu0 0
  %1275 = vmatpush1.bf16.msra.mxu0 0
  %1276 = vmatprep.subr.bf16.mxu0 0
  %1277 = vmatpush1.bf16.msra.mxu0 0
  %1278 = vmatprep.subr.bf16.mxu0 0
  %1279 = vmatpush1.bf16.msra.mxu0 0
  %1280 = vmatprep.subr.bf16.mxu0 0
  %1281 = vmatpush1.bf16.msra.mxu0 0
  %1282 = vmatprep.subr.bf16.mxu0 0
  %1283 = vmatpush1.bf16.msra.mxu0 0
  %1284 = vmatprep.subr.bf16.mxu0 0
  %1285 = vmatpush1.bf16.msra.mxu0 0
  %1286 = vmatprep.subr.bf16.mxu0 0
  %1287 = vmatpush1.bf16.msra.mxu0 0
  %1288 = vmatprep.subr.bf16.mxu0 0
  %1289 = vmatpush1.bf16.msra.mxu0 0
  %1290 = vmatprep.mubr.bf16.mxu0 0
  %1291 = vmatmul.mubr.bf16.gmra.mrb[0].mxu0 %v1256
  %v1292 = vpop.f32.mrb[0].mxu0
  %v1293 = vadd.f32 0.0, %v1292
  %v1294 = vpop.f32.mrb[0].mxu0
  %v1295 = vadd.f32 0.0, %v1294
  %v1296 = vpop.f32.mrb[0].mxu0
  %v1297 = vadd.f32 0.0, %v1296
  %v1298 = vpop.f32.mrb[0].mxu0
  %v1299 = vadd.f32 0.0, %v1298
  %1300 = vdwg.mxu0
  %1301 = vmatprep.subr.bf16.mxu0 %v1242
  %1302 = vmatpush1.bf16.msra.mxu0 %v1241
  %1303 = vmatprep.subr.bf16.mxu0 %v1246
  %1304 = vmatpush1.bf16.msra.mxu0 %v1245
  %1305 = vmatprep.subr.bf16.mxu0 0
  %1306 = vmatpush1.bf16.msra.mxu0 0
  %1307 = vmatprep.subr.bf16.mxu0 0
  %1308 = vmatpush1.bf16.msra.mxu0 0
  %1309 = vmatprep.subr.bf16.mxu0 0
  %1310 = vmatpush1.bf16.msra.mxu0 0
  %1311 = vmatprep.subr.bf16.mxu0 0
  %1312 = vmatpush1.bf16.msra.mxu0 0
  %1313 = vmatprep.subr.bf16.mxu0 0
  %1314 = vmatpush1.bf16.msra.mxu0 0
  %1315 = vmatprep.subr.bf16.mxu0 0
  %1316 = vmatpush1.bf16.msra.mxu0 0
  %1317 = vmatprep.subr.bf16.mxu0 0
  %1318 = vmatpush1.bf16.msra.mxu0 0
  %1319 = vmatprep.subr.bf16.mxu0 0
  %1320 = vmatpush1.bf16.msra.mxu0 0
  %1321 = vmatprep.subr.bf16.mxu0 0
  %1322 = vmatpush1.bf16.msra.mxu0 0
  %1323 = vmatprep.subr.bf16.mxu0 0
  %1324 = vmatpush1.bf16.msra.mxu0 0
  %1325 = vmatprep.subr.bf16.mxu0 0
  %1326 = vmatpush1.bf16.msra.mxu0 0
  %1327 = vmatprep.subr.bf16.mxu0 0
  %1328 = vmatpush1.bf16.msra.mxu0 0
  %1329 = vmatprep.subr.bf16.mxu0 0
  %1330 = vmatpush1.bf16.msra.mxu0 0
  %1331 = vmatprep.subr.bf16.mxu0 0
  %1332 = vmatpush1.bf16.msra.mxu0 0
  %1333 = vmatprep.mubr.bf16.mxu0 0
  %1334 = vmatmul.mubr.bf16.gmra.mrb[0].mxu0 %v1256
  %v1335 = vpop.f32.mrb[0].mxu0
  %v1336 = vadd.f32 0.0, %v1335
  %v1337 = vpop.f32.mrb[0].mxu0
  %v1338 = vadd.f32 0.0, %v1337
  %v1339 = vpop.f32.mrb[0].mxu0
  %v1340 = vadd.f32 0.0, %v1339
  %v1341 = vpop.f32.mrb[0].mxu0
  %v1342 = vadd.f32 0.0, %v1341
  %1343 = vdwg.mxu0
  %v1344 = vadd.f32 %v1198, %v1293
  %v1345 = vadd.f32 %v1199, %v1295
  %v1346 = vadd.f32 %v1200, %v1336
  %v1347 = vadd.f32 %v1201, %v1338
  %v1348 = vadd.f32 %v1202, %v1297
  %v1349 = vadd.f32 %v1203, %v1299
  %v1350 = vadd.f32 %v1204, %v1340
  %v1351 = vadd.f32 %v1205, %v1342
  %v1352 = vmax.f32 %v1344, 0.0
  %v1353 = vmax.f32 %v1345, 0.0
  %v1354 = vmax.f32 %v1346, 0.0
  %v1355 = vmax.f32 %v1347, 0.0
  %v1356 = vmax.f32 %v1348, 0.0
  %v1357 = vmax.f32 %v1349, 0.0
  %v1358 = vmax.f32 %v1350, 0.0
  %v1359 = vmax.f32 %v1351, 0.0
  %1360 = vst [vmem:[%s8] sm:$0xff] %v1352
  %1361 = vst [vmem:[%s8 + $0x8] sm:$0xff] %v1353
  %1362 = vst [vmem:[%s8 + $0x10] sm:$0xff] %v1354
  %1363 = vst [vmem:[%s8 + $0x18] sm:$0xff] %v1355
  %1364 = vst [vmem:[%s8 + $0x20] sm:$0xff] %v1356
  %1365 = vst [vmem:[%s8 + $0x28] sm:$0xff] %v1357
  %1366 = vst [vmem:[%s8 + $0x30] sm:$0xff] %v1358
  %1367 = vst [vmem:[%s8 + $0x38] sm:$0xff] %v1359
  // Predicated region
  $region34: #{encoder_forward.1} parent=0 // pred_check
    _
  $region35: #{encoder_forward.1} parent=0 // pred_check_branch
    %1369 = sbr.rel (0) target = $region37
  $region36: #{encoder_forward.1} parent=0 // pred_region
    _
  $region37: #{encoder_forward.1} parent=0 // pred_fallthru
    _
  // Predicated region
  $region38: #{encoder_forward.1} parent=0 // pred_check
    _
  $region39: #{encoder_forward.1} parent=0 // pred_check_branch
    %1371 = sbr.rel (0) target = $region41
  $region40: #{encoder_forward.1} parent=0 // pred_region
    _
  $region41: #{encoder_forward.1} parent=0 // pred_fallthru
    _

</llo_original>
